<compile_context>
chip_gen: v7x
topology: tpu7x:2x2x1
jax: 0.10.0
libtpu: 0.0.40
codegen_flags: <defaults>
</compile_context>

<pallas_src>
import functools

import jax
import jax.numpy as jnp
import numpy as np
from jax.experimental import pallas as pl
from jax.experimental.pallas import tpu as pltpu


def _mxu_dot(a, b):
    """bf16-operand MXU matmul with f32 accumulation (native single-pass MXU path)."""
    return jnp.dot(a.astype(jnp.bfloat16), b.astype(jnp.bfloat16),
                   preferred_element_type=jnp.float32)


# ----------------------------------------------------------------------------
# Fused Pallas kernel: (GATConv -> [ReLU]) x L  ->  global_add_pool ('sum')
# ----------------------------------------------------------------------------
def fused_gat_gc_kernel(*refs, layer_cfgs):
    """refs layout (inputs, then output):

      [0] x          [N, F_in]            f32   node features
      [1] mask       [N, N]               bf16  additive adjacency mask (0 on edges/self
                                                loops, -1e30 elsewhere)
      [2] onehot     [G, N]               bf16  graph-membership one-hot (exact in bf16)
      [3] att_stack  [L, HCmax, 2Hmax]    f32   per-layer block-diagonal att matrices
      [4] bias_stack [L, 1, HCmax]        f32   per-layer bias rows
      [5..5+L-1] W_l [F_prev_l, HC_l]     bf16  per-layer weight matrices
      [5+L] out_ref  [G, HC_last]         f32
    """
    n_layers = len(layer_cfgs)
    x_ref, mask_ref, onehot_ref, att_ref, bias_ref = refs[:5]
    w_refs = refs[5:5 + n_layers]
    out_ref = refs[5 + n_layers]

    n = mask_ref.shape[0]
    mask_bf = mask_ref[...]                                  # [N, N] bf16, stays bf16 [2][3]

    h = x_ref[...]                                           # value-resident features  [1]
    for li, (H, C, slope, relu) in enumerate(layer_cfgs):
        HC = H * C
        xp = _mxu_dot(h, w_refs[li][...])                    # [N, HC]  (bf16 MXU)      [4]

        # Attention coefficients: ONE tiny matmul against the block-diagonal att matrix
        # (replaces 2H lane-slice reductions + concats).                                [5]
        att_mat = att_ref[li][:HC, :2 * H]                   # [HC, 2H]
        coef = _mxu_dot(xp, att_mat)                         # [N, 2H]
        a_src_t = coef[:, :H].T                              # [H, N]  (one tiny transpose)
        a_dst = coef[:, H:2 * H]                              # [N, H]

        # Head-stacked logits slab [H*N, N]; mask broadcast-added per head (bf16->f32
        # upcast fused into the add, no H-fold mask copy, no resident f32 mask).     [2][3]
        blocks = []
        for hh in range(H):
            lh = a_dst[:, hh:hh + 1] + a_src_t[hh:hh + 1, :]  # [N, N]
            lh = jnp.where(lh >= 0, lh, slope * lh)           # LeakyReLU
            blocks.append(lh + mask_bf.astype(jnp.float32))
        e = jnp.concatenate(blocks, axis=0)                   # [H*N, N]

        # Softmax over sources, once for all heads; everything in f32 on the VPU/EUP. [10]
        m = jnp.max(e, axis=-1, keepdims=True)
        p = jnp.exp(e - m)
        denom = jnp.sum(p, axis=-1, keepdims=True)
        inv = pl.reciprocal(denom, approx=True)               # EUP fast path
        inv = inv * (2.0 - denom * inv)                       # one Newton step -> ~f32
        attn = p * inv                                        # [H*N, N]

        # Per-head aggregation (bf16 MXU, f32 acc); results assembled in registers —
        # no per-head column-slice stores into a scratch buffer.                      [1][4]
        segs = [_mxu_dot(attn[hh * n:(hh + 1) * n, :], xp[:, hh * C:(hh + 1) * C])
                for hh in range(H)]
        h = jnp.concatenate(segs, axis=-1) + bias_ref[li][:, :HC]   # [N, HC]
        if relu:
            h = jnp.maximum(h, 0.0)

    # readout_type='sum' -> global_add_pool, ONCE on the assembled output; single
    # full-block (lane-dense as possible) store.                                      [1][6]
    out_ref[...] = _mxu_dot(onehot_ref[...], h)


# ----------------------------------------------------------------------------
# Wrapper: densify graph, pack params, single pallas_call
# ----------------------------------------------------------------------------
def gat_gc_forward(x, edge_index, batch, params, *, negative_slope, num_graphs,
                   reverse=False):
    N = x.shape[0]
    src, dst = edge_index[0], edge_index[1]
    if reverse:
        src, dst = dst, src

    # Dense adjacency adj[dst, src] with self-loops (PyG GATConv add_self_loops=True),
    # converted ONCE to an additive softmax mask shipped as bf16 (half the DMA bytes; it
    # never touches the MXU).  bf16 keeps the f32 exponent range, so -1e30 survives.
    adj = jnp.zeros((N, N), jnp.float32).at[dst, src].set(1.0)
    adj = jnp.maximum(adj, jnp.eye(N, dtype=jnp.float32))
    mask_add = jnp.where(adj > 0, 0.0, -1e30).astype(jnp.bfloat16)
    onehot = (batch[None, :] == jnp.arange(num_graphs, dtype=batch.dtype)[:, None]
              ).astype(jnp.bfloat16)                          # exact in bf16 (0/1)

    # Per the module definition, the first GATConv and the out GATConv are constructed
    # without a negative_slope argument (PyG default 0.2); only the middle layers receive
    # the constructor's negative_slope.
    layer_params = list(params["layers"]) + [params["out"]]
    n_hidden_layers = len(params["layers"])
    slopes = [0.2] + [negative_slope] * (n_hidden_layers - 1) + [0.2]
    relus = [True] * n_hidden_layers + [False]

    cfgs, w_list, att_list, bias_list = [], [], [], []
    for (W, a_s, a_d, b), slope, relu in zip(layer_params, slopes, relus):
        H, C = a_s.shape
        HC = H * C
        cfgs.append((H, C, float(slope), bool(relu)))
        w_list.append(W.astype(jnp.bfloat16))                 # bf16 MXU operand ship  [4]
        # Block-diagonal [HC, 2H] attention matrix: column h <- att_src[h],
        # column H+h <- att_dst[h].                                                    [5]
        am = jnp.zeros((HC, 2 * H), jnp.float32)
        for h in range(H):
            am = am.at[h * C:(h + 1) * C, h].set(a_s[h])
            am = am.at[h * C:(h + 1) * C, H + h].set(a_d[h])
        att_list.append(am)
        bias_list.append(jnp.reshape(b, (1, HC)).astype(jnp.float32))

    # Pack the small per-layer parameters into two stacked inputs (fewer DMA descriptors
    # and (8,128)-padded VMEM allocations).                                           [8]
    L = len(cfgs)
    hc_max = max(h * c for h, c, _, _ in cfgs)
    h2_max = max(2 * h for h, c, _, _ in cfgs)
    att_stack = jnp.zeros((L, hc_max, h2_max), jnp.float32)
    bias_stack = jnp.zeros((L, 1, hc_max), jnp.float32)
    for li in range(L):
        am, br = att_list[li], bias_list[li]
        att_stack = att_stack.at[li, :am.shape[0], :am.shape[1]].set(am)
        bias_stack = bias_stack.at[li, :, :br.shape[1]].set(br)

    out_hc = cfgs[-1][0] * cfgs[-1][1]
    flat_inputs = [x, mask_add, onehot, att_stack, bias_stack] + w_list

    def full_spec(a):
        if a.ndim == 2:
            return pl.BlockSpec(a.shape, lambda i: (0, 0))
        return pl.BlockSpec(a.shape, lambda i: (0, 0, 0))

    kernel = functools.partial(fused_gat_gc_kernel, layer_cfgs=tuple(cfgs))
    return pl.pallas_call(
        kernel,
        out_shape=jax.ShapeDtypeStruct((num_graphs, out_hc), jnp.float32),
        grid=(1,),
        in_specs=[full_spec(a) for a in flat_inputs],
        out_specs=pl.BlockSpec((num_graphs, out_hc), lambda i: (0, 0)),
        compiler_params=pltpu.CompilerParams(dimension_semantics=("arbitrary",)),
    )(*flat_inputs)


# ----------------------------------------------------------------------------
# Pure-JAX reference (same math, same bf16-MXU-operand policy) for the sanity check
# ----------------------------------------------------------------------------
def _b16(a):
    return a.astype(jnp.bfloat16)


def gat_conv_ref(x, params, adj, negative_slope):
    W, att_src, att_dst, bias = params
    H, C = att_src.shape
    xp = jnp.dot(_b16(x), _b16(W), preferred_element_type=jnp.float32).reshape(-1, H, C)
    a_src = jnp.einsum("nhc,hc->nh", _b16(xp), _b16(att_src),
                       preferred_element_type=jnp.float32)
    a_dst = jnp.einsum("nhc,hc->nh", _b16(xp), _b16(att_dst),
                       preferred_element_type=jnp.float32)
    logits = a_dst[:, None, :] + a_src[None, :, :]            # [Ndst, Nsrc, H]
    e = jnp.where(logits >= 0, logits, negative_slope * logits)
    e = jnp.where(adj[:, :, None] > 0, e, -1e30)
    attn = jax.nn.softmax(e, axis=1)
    out = jnp.einsum("ijh,jhc->ihc", _b16(attn), _b16(xp),
                     preferred_element_type=jnp.float32).reshape(-1, H * C) + bias
    return out


def gat_gc_forward_ref(x, edge_index, batch, params, *, negative_slope, num_graphs):
    N = x.shape[0]
    adj = jnp.zeros((N, N), jnp.float32).at[edge_index[1], edge_index[0]].set(1.0)
    adj = jnp.maximum(adj, jnp.eye(N, dtype=jnp.float32))
    h = jax.nn.relu(gat_conv_ref(x, params["layers"][0], adj, 0.2))
    for p in params["layers"][1:]:
        h = jax.nn.relu(gat_conv_ref(h, p, adj, negative_slope))
    h = gat_conv_ref(h, params["out"], adj, 0.2)
    onehot = (batch[None, :] == jnp.arange(num_graphs, dtype=batch.dtype)[:, None]
              ).astype(jnp.float32)
    return jnp.dot(_b16(onehot), _b16(h), preferred_element_type=jnp.float32)


# ----------------------------------------------------------------------------
# Main
# ----------------------------------------------------------------------------
if __name__ == "__main__":
    # Module hyperparameters (small, consistent with GAT_gc.__init__)
    n_layers = 2
    in_dim, n_hidden, out_dim = 8, 16, 4
    heads = [2, 2]
    negative_slope = 0.2
    num_graphs = 2
    nodes_per_graph = 8
    N = num_graphs * nodes_per_graph

    key = jax.random.PRNGKey(0)

    def init_gatconv(k, f_in, out_ch, n_heads):
        k1, k2, k3, k4 = jax.random.split(k, 4)
        scale = 1.0 / np.sqrt(f_in)
        W = jax.random.normal(k1, (f_in, n_heads * out_ch), jnp.float32) * scale
        a_s = jax.random.normal(k2, (n_heads, out_ch), jnp.float32) * 0.1
        a_d = jax.random.normal(k3, (n_heads, out_ch), jnp.float32) * 0.1
        b = jax.random.normal(k4, (n_heads * out_ch,), jnp.float32) * 0.01
        return (W, a_s, a_d, b)

    key, k0, k1, k2, kx = jax.random.split(key, 5)
    params = {
        "layers": [
            init_gatconv(k0, in_dim, n_hidden, heads[0]),                  # GATConv(in, hid, h0)
            init_gatconv(k1, n_hidden * heads[0], n_hidden, heads[1]),     # GATConv(hid*h0, hid, h1)
        ],
        "out": init_gatconv(k2, n_hidden * heads[0], out_dim, heads[-1]),  # GATConv(hid*h0, out, h-1)
    }

    # Synthetic graph batch: 2 ring graphs of 8 nodes each (bidirectional edges).
    edges = []
    for g in range(num_graphs):
        base = g * nodes_per_graph
        for k_ in range(nodes_per_graph):
            a, b = base + k_, base + (k_ + 1) % nodes_per_graph
            edges.append((a, b))
            edges.append((b, a))
    edge_index = jnp.array(np.array(edges, dtype=np.int32).T)             # [2, E]
    batch = jnp.repeat(jnp.arange(num_graphs, dtype=jnp.int32), nodes_per_graph)
    x = jax.random.normal(kx, (N, in_dim), jnp.float32)

    out = gat_gc_forward(x, edge_index, batch, params,
                         negative_slope=negative_slope, num_graphs=num_graphs)
    out = jax.block_until_ready(out)

    ref = gat_gc_forward_ref(x, edge_index, batch, params,
                             negative_slope=negative_slope, num_graphs=num_graphs)
    ref = jax.block_until_ready(ref)

    assert out.shape == (num_graphs, out_dim * heads[-1]), out.shape
    assert np.all(np.isfinite(np.asarray(out)))
    # The reference mirrors the kernel's bf16-MXU-operand / f32-accumulate policy, so the
    # remaining differences are only the EUP approx-reciprocal (+1 Newton step), f32
    # accumulation-order noise, and rare bf16 rounding-boundary flips on intermediates.
    np.testing.assert_allclose(np.asarray(out), np.asarray(ref), rtol=1e-2, atol=1e-2)

    print("KERNEL_OK")
</pallas_src>

<mosaic_0001>
module attributes {stable_mosaic.version = 11 : i64} {
  func.func @fused_gat_gc_kernel(%arg0: i32, %arg1: memref<16x8xf32, #tpu.memory_space<vmem>>, %arg2: memref<16x16xbf16, #tpu.memory_space<vmem>>, %arg3: memref<2x16xbf16, #tpu.memory_space<vmem>>, %arg4: memref<3x32x4xf32, #tpu.memory_space<vmem>>, %arg5: memref<3x1x32xf32, #tpu.memory_space<vmem>>, %arg6: memref<8x32xbf16, #tpu.memory_space<vmem>>, %arg7: memref<32x32xbf16, #tpu.memory_space<vmem>>, %arg8: memref<32x8xbf16, #tpu.memory_space<vmem>>, %arg9: memref<2x8xf32, #tpu.memory_space<vmem>>) attributes {dimension_semantics = [#tpu.dimension_semantics<arbitrary>], iteration_bounds = array<i64: 1>, scalar_prefetch = 0 : i64, scratch_operands = 0 : i64, tpu.core_type = #tpu.core_type<tc>, window_params = [{pipeline_mode = #tpu.pipeline_mode<synchronous>, transform_indices = @transform_0, window_bounds = array<i64: 16, 8>}, {pipeline_mode = #tpu.pipeline_mode<synchronous>, transform_indices = @transform_1, window_bounds = array<i64: 16, 16>}, {pipeline_mode = #tpu.pipeline_mode<synchronous>, transform_indices = @transform_2, window_bounds = array<i64: 2, 16>}, {pipeline_mode = #tpu.pipeline_mode<synchronous>, transform_indices = @transform_3, window_bounds = array<i64: 3, 32, 4>}, {pipeline_mode = #tpu.pipeline_mode<synchronous>, transform_indices = @transform_4, window_bounds = array<i64: 3, 1, 32>}, {pipeline_mode = #tpu.pipeline_mode<synchronous>, transform_indices = @transform_5, window_bounds = array<i64: 8, 32>}, {pipeline_mode = #tpu.pipeline_mode<synchronous>, transform_indices = @transform_6, window_bounds = array<i64: 32, 32>}, {pipeline_mode = #tpu.pipeline_mode<synchronous>, transform_indices = @transform_7, window_bounds = array<i64: 32, 8>}, {pipeline_mode = #tpu.pipeline_mode<synchronous>, transform_indices = @transform_8, window_bounds = array<i64: 2, 8>}]} {
    %c0 = arith.constant 0 : index
    %c0_0 = arith.constant 0 : index
    %0 = vector.load %arg2[%c0, %c0_0] : memref<16x16xbf16, #tpu.memory_space<vmem>>, vector<16x16xbf16>
    %c0_1 = arith.constant 0 : index
    %c0_2 = arith.constant 0 : index
    %1 = vector.load %arg1[%c0_1, %c0_2] : memref<16x8xf32, #tpu.memory_space<vmem>>, vector<16x8xf32>
    %c0_3 = arith.constant 0 : index
    %c0_4 = arith.constant 0 : index
    %2 = vector.load %arg6[%c0_3, %c0_4] : memref<8x32xbf16, #tpu.memory_space<vmem>>, vector<8x32xbf16>
    %3 = arith.truncf %1 : vector<16x8xf32> to vector<16x8xbf16>
    %cst = arith.constant dense<0.000000e+00> : vector<16x32xf32>
    %4 = tpu.matmul %3, %2, %cst {dimension_numbers = #tpu.dot_dimension_numbers<[1], [0], [0], [1], [0, 0, 1, 1], [], []>} : vector<16x8xbf16>, vector<8x32xbf16>, vector<16x32xf32> -> vector<16x32xf32>
    %c0_5 = arith.constant 0 : index
    %c0_6 = arith.constant 0 : index
    %c0_7 = arith.constant 0 : index
    %5 = vector.load %arg4[%c0_5, %c0_6, %c0_7] : memref<3x32x4xf32, #tpu.memory_space<vmem>>, vector<1x32x4xf32>
    %6 = vector.shape_cast %5 : vector<1x32x4xf32> to vector<32x4xf32>
    %7 = arith.truncf %4 : vector<16x32xf32> to vector<16x32xbf16>
    %8 = arith.truncf %6 : vector<32x4xf32> to vector<32x4xbf16>
    %cst_8 = arith.constant dense<0.000000e+00> : vector<16x4xf32>
    %9 = tpu.matmul %7, %8, %cst_8 {dimension_numbers = #tpu.dot_dimension_numbers<[1], [0], [0], [1], [0, 0, 1, 1], [], []>} : vector<16x32xbf16>, vector<32x4xbf16>, vector<16x4xf32> -> vector<16x4xf32>
    %10 = vector.extract_strided_slice %9 {offsets = [0, 0], sizes = [16, 2], strides = [1, 1]} : vector<16x4xf32> to vector<16x2xf32>
    %11 = tpu.transpose %10, [1, 0] : vector<16x2xf32> -> vector<2x16xf32>
    %12 = vector.extract_strided_slice %9 {offsets = [0, 2], sizes = [16, 2], strides = [1, 1]} : vector<16x4xf32> to vector<16x2xf32>
    %13 = vector.extract_strided_slice %12 {offsets = [0, 0], sizes = [16, 1], strides = [1, 1]} : vector<16x2xf32> to vector<16x1xf32>
    %14 = vector.extract_strided_slice %11 {offsets = [0, 0], sizes = [1, 16], strides = [1, 1]} : vector<2x16xf32> to vector<1x16xf32>
    %15 = vector.broadcast %13 : vector<16x1xf32> to vector<16x16xf32>
    %16 = vector.broadcast %14 : vector<1x16xf32> to vector<16x16xf32>
    %17 = arith.addf %15, %16 : vector<16x16xf32>
    %cst_9 = arith.constant 0.000000e+00 : f32
    %18 = vector.broadcast %cst_9 : f32 to vector<16x16xf32>
    %19 = arith.cmpf oge, %17, %18 : vector<16x16xf32>
    %cst_10 = arith.constant 2.000000e-01 : f32
    %20 = vector.broadcast %cst_10 : f32 to vector<16x16xf32>
    %21 = arith.mulf %20, %17 : vector<16x16xf32>
    %22 = arith.select %19, %17, %21 : vector<16x16xi1>, vector<16x16xf32>
    %23 = arith.extf %0 : vector<16x16xbf16> to vector<16x16xf32>
    %24 = arith.addf %22, %23 : vector<16x16xf32>
    %25 = vector.extract_strided_slice %12 {offsets = [0, 1], sizes = [16, 1], strides = [1, 1]} : vector<16x2xf32> to vector<16x1xf32>
    %26 = vector.extract_strided_slice %11 {offsets = [1, 0], sizes = [1, 16], strides = [1, 1]} : vector<2x16xf32> to vector<1x16xf32>
    %27 = vector.broadcast %25 : vector<16x1xf32> to vector<16x16xf32>
    %28 = vector.broadcast %26 : vector<1x16xf32> to vector<16x16xf32>
    %29 = arith.addf %27, %28 : vector<16x16xf32>
    %cst_11 = arith.constant 0.000000e+00 : f32
    %30 = vector.broadcast %cst_11 : f32 to vector<16x16xf32>
    %31 = arith.cmpf oge, %29, %30 : vector<16x16xf32>
    %cst_12 = arith.constant 2.000000e-01 : f32
    %32 = vector.broadcast %cst_12 : f32 to vector<16x16xf32>
    %33 = arith.mulf %32, %29 : vector<16x16xf32>
    %34 = arith.select %31, %29, %33 : vector<16x16xi1>, vector<16x16xf32>
    %35 = arith.extf %0 : vector<16x16xbf16> to vector<16x16xf32>
    %36 = arith.addf %34, %35 : vector<16x16xf32>
    %37 = tpu.concatenate %24, %36 in 0 : vector<16x16xf32>, vector<16x16xf32> -> vector<32x16xf32>
    %cst_13 = arith.constant dense<0xFF800000> : vector<32xf32>
    %38 = vector.multi_reduction <maximumf>, %37, %cst_13 [1] : vector<32x16xf32> to vector<32xf32>
    %39 = vector.shape_cast %38 : vector<32xf32> to vector<32x1xf32>
    %40 = vector.broadcast %39 : vector<32x1xf32> to vector<32x16xf32>
    %41 = arith.subf %37, %40 : vector<32x16xf32>
    %42 = math.exp %41 : vector<32x16xf32>
    %cst_14 = arith.constant dense<0.000000e+00> : vector<32xf32>
    %43 = vector.multi_reduction <add>, %42, %cst_14 [1] : vector<32x16xf32> to vector<32xf32>
    %44 = vector.shape_cast %43 : vector<32xf32> to vector<32x1xf32>
    %45 = tpu.reciprocal %44 {approx = true} : vector<32x1xf32> -> vector<32x1xf32>
    %46 = arith.mulf %44, %45 : vector<32x1xf32>
    %cst_15 = arith.constant 2.000000e+00 : f32
    %47 = vector.broadcast %cst_15 : f32 to vector<32x1xf32>
    %48 = arith.subf %47, %46 : vector<32x1xf32>
    %49 = arith.mulf %45, %48 : vector<32x1xf32>
    %50 = vector.broadcast %49 : vector<32x1xf32> to vector<32x16xf32>
    %51 = arith.mulf %42, %50 : vector<32x16xf32>
    %52 = vector.extract_strided_slice %51 {offsets = [0, 0], sizes = [16, 16], strides = [1, 1]} : vector<32x16xf32> to vector<16x16xf32>
    %53 = vector.extract_strided_slice %4 {offsets = [0, 0], sizes = [16, 16], strides = [1, 1]} : vector<16x32xf32> to vector<16x16xf32>
    %54 = arith.truncf %52 : vector<16x16xf32> to vector<16x16xbf16>
    %55 = arith.truncf %53 : vector<16x16xf32> to vector<16x16xbf16>
    %cst_16 = arith.constant dense<0.000000e+00> : vector<16x16xf32>
    %56 = tpu.matmul %54, %55, %cst_16 {dimension_numbers = #tpu.dot_dimension_numbers<[1], [0], [0], [1], [0, 0, 1, 1], [], []>} : vector<16x16xbf16>, vector<16x16xbf16>, vector<16x16xf32> -> vector<16x16xf32>
    %57 = vector.extract_strided_slice %51 {offsets = [16, 0], sizes = [16, 16], strides = [1, 1]} : vector<32x16xf32> to vector<16x16xf32>
    %58 = vector.extract_strided_slice %4 {offsets = [0, 16], sizes = [16, 16], strides = [1, 1]} : vector<16x32xf32> to vector<16x16xf32>
    %59 = arith.truncf %57 : vector<16x16xf32> to vector<16x16xbf16>
    %60 = arith.truncf %58 : vector<16x16xf32> to vector<16x16xbf16>
    %cst_17 = arith.constant dense<0.000000e+00> : vector<16x16xf32>
    %61 = tpu.matmul %59, %60, %cst_17 {dimension_numbers = #tpu.dot_dimension_numbers<[1], [0], [0], [1], [0, 0, 1, 1], [], []>} : vector<16x16xbf16>, vector<16x16xbf16>, vector<16x16xf32> -> vector<16x16xf32>
    %62 = tpu.concatenate %56, %61 in 1 : vector<16x16xf32>, vector<16x16xf32> -> vector<16x32xf32>
    %c0_18 = arith.constant 0 : index
    %c0_19 = arith.constant 0 : index
    %c0_20 = arith.constant 0 : index
    %63 = vector.load %arg5[%c0_18, %c0_19, %c0_20] : memref<3x1x32xf32, #tpu.memory_space<vmem>>, vector<1x1x32xf32>
    %64 = vector.shape_cast %63 : vector<1x1x32xf32> to vector<1x32xf32>
    %65 = vector.broadcast %64 : vector<1x32xf32> to vector<16x32xf32>
    %66 = arith.addf %62, %65 : vector<16x32xf32>
    %cst_21 = arith.constant 0.000000e+00 : f32
    %67 = vector.broadcast %cst_21 : f32 to vector<16x32xf32>
    %68 = arith.maximumf %66, %67 : vector<16x32xf32>
    %c0_22 = arith.constant 0 : index
    %c0_23 = arith.constant 0 : index
    %69 = vector.load %arg7[%c0_22, %c0_23] : memref<32x32xbf16, #tpu.memory_space<vmem>>, vector<32x32xbf16>
    %70 = arith.truncf %68 : vector<16x32xf32> to vector<16x32xbf16>
    %cst_24 = arith.constant dense<0.000000e+00> : vector<16x32xf32>
    %71 = tpu.matmul %70, %69, %cst_24 {dimension_numbers = #tpu.dot_dimension_numbers<[1], [0], [0], [1], [0, 0, 1, 1], [], []>} : vector<16x32xbf16>, vector<32x32xbf16>, vector<16x32xf32> -> vector<16x32xf32>
    %c1 = arith.constant 1 : index
    %c0_25 = arith.constant 0 : index
    %c0_26 = arith.constant 0 : index
    %72 = vector.load %arg4[%c1, %c0_25, %c0_26] : memref<3x32x4xf32, #tpu.memory_space<vmem>>, vector<1x32x4xf32>
    %73 = vector.shape_cast %72 : vector<1x32x4xf32> to vector<32x4xf32>
    %74 = arith.truncf %71 : vector<16x32xf32> to vector<16x32xbf16>
    %75 = arith.truncf %73 : vector<32x4xf32> to vector<32x4xbf16>
    %cst_27 = arith.constant dense<0.000000e+00> : vector<16x4xf32>
    %76 = tpu.matmul %74, %75, %cst_27 {dimension_numbers = #tpu.dot_dimension_numbers<[1], [0], [0], [1], [0, 0, 1, 1], [], []>} : vector<16x32xbf16>, vector<32x4xbf16>, vector<16x4xf32> -> vector<16x4xf32>
    %77 = vector.extract_strided_slice %76 {offsets = [0, 0], sizes = [16, 2], strides = [1, 1]} : vector<16x4xf32> to vector<16x2xf32>
    %78 = tpu.transpose %77, [1, 0] : vector<16x2xf32> -> vector<2x16xf32>
    %79 = vector.extract_strided_slice %76 {offsets = [0, 2], sizes = [16, 2], strides = [1, 1]} : vector<16x4xf32> to vector<16x2xf32>
    %80 = vector.extract_strided_slice %79 {offsets = [0, 0], sizes = [16, 1], strides = [1, 1]} : vector<16x2xf32> to vector<16x1xf32>
    %81 = vector.extract_strided_slice %78 {offsets = [0, 0], sizes = [1, 16], strides = [1, 1]} : vector<2x16xf32> to vector<1x16xf32>
    %82 = vector.broadcast %80 : vector<16x1xf32> to vector<16x16xf32>
    %83 = vector.broadcast %81 : vector<1x16xf32> to vector<16x16xf32>
    %84 = arith.addf %82, %83 : vector<16x16xf32>
    %cst_28 = arith.constant 0.000000e+00 : f32
    %85 = vector.broadcast %cst_28 : f32 to vector<16x16xf32>
    %86 = arith.cmpf oge, %84, %85 : vector<16x16xf32>
    %cst_29 = arith.constant 2.000000e-01 : f32
    %87 = vector.broadcast %cst_29 : f32 to vector<16x16xf32>
    %88 = arith.mulf %87, %84 : vector<16x16xf32>
    %89 = arith.select %86, %84, %88 : vector<16x16xi1>, vector<16x16xf32>
    %90 = arith.extf %0 : vector<16x16xbf16> to vector<16x16xf32>
    %91 = arith.addf %89, %90 : vector<16x16xf32>
    %92 = vector.extract_strided_slice %79 {offsets = [0, 1], sizes = [16, 1], strides = [1, 1]} : vector<16x2xf32> to vector<16x1xf32>
    %93 = vector.extract_strided_slice %78 {offsets = [1, 0], sizes = [1, 16], strides = [1, 1]} : vector<2x16xf32> to vector<1x16xf32>
    %94 = vector.broadcast %92 : vector<16x1xf32> to vector<16x16xf32>
    %95 = vector.broadcast %93 : vector<1x16xf32> to vector<16x16xf32>
    %96 = arith.addf %94, %95 : vector<16x16xf32>
    %cst_30 = arith.constant 0.000000e+00 : f32
    %97 = vector.broadcast %cst_30 : f32 to vector<16x16xf32>
    %98 = arith.cmpf oge, %96, %97 : vector<16x16xf32>
    %cst_31 = arith.constant 2.000000e-01 : f32
    %99 = vector.broadcast %cst_31 : f32 to vector<16x16xf32>
    %100 = arith.mulf %99, %96 : vector<16x16xf32>
    %101 = arith.select %98, %96, %100 : vector<16x16xi1>, vector<16x16xf32>
    %102 = arith.extf %0 : vector<16x16xbf16> to vector<16x16xf32>
    %103 = arith.addf %101, %102 : vector<16x16xf32>
    %104 = tpu.concatenate %91, %103 in 0 : vector<16x16xf32>, vector<16x16xf32> -> vector<32x16xf32>
    %cst_32 = arith.constant dense<0xFF800000> : vector<32xf32>
    %105 = vector.multi_reduction <maximumf>, %104, %cst_32 [1] : vector<32x16xf32> to vector<32xf32>
    %106 = vector.shape_cast %105 : vector<32xf32> to vector<32x1xf32>
    %107 = vector.broadcast %106 : vector<32x1xf32> to vector<32x16xf32>
    %108 = arith.subf %104, %107 : vector<32x16xf32>
    %109 = math.exp %108 : vector<32x16xf32>
    %cst_33 = arith.constant dense<0.000000e+00> : vector<32xf32>
    %110 = vector.multi_reduction <add>, %109, %cst_33 [1] : vector<32x16xf32> to vector<32xf32>
    %111 = vector.shape_cast %110 : vector<32xf32> to vector<32x1xf32>
    %112 = tpu.reciprocal %111 {approx = true} : vector<32x1xf32> -> vector<32x1xf32>
    %113 = arith.mulf %111, %112 : vector<32x1xf32>
    %cst_34 = arith.constant 2.000000e+00 : f32
    %114 = vector.broadcast %cst_34 : f32 to vector<32x1xf32>
    %115 = arith.subf %114, %113 : vector<32x1xf32>
    %116 = arith.mulf %112, %115 : vector<32x1xf32>
    %117 = vector.broadcast %116 : vector<32x1xf32> to vector<32x16xf32>
    %118 = arith.mulf %109, %117 : vector<32x16xf32>
    %119 = vector.extract_strided_slice %118 {offsets = [0, 0], sizes = [16, 16], strides = [1, 1]} : vector<32x16xf32> to vector<16x16xf32>
    %120 = vector.extract_strided_slice %71 {offsets = [0, 0], sizes = [16, 16], strides = [1, 1]} : vector<16x32xf32> to vector<16x16xf32>
    %121 = arith.truncf %119 : vector<16x16xf32> to vector<16x16xbf16>
    %122 = arith.truncf %120 : vector<16x16xf32> to vector<16x16xbf16>
    %cst_35 = arith.constant dense<0.000000e+00> : vector<16x16xf32>
    %123 = tpu.matmul %121, %122, %cst_35 {dimension_numbers = #tpu.dot_dimension_numbers<[1], [0], [0], [1], [0, 0, 1, 1], [], []>} : vector<16x16xbf16>, vector<16x16xbf16>, vector<16x16xf32> -> vector<16x16xf32>
    %124 = vector.extract_strided_slice %118 {offsets = [16, 0], sizes = [16, 16], strides = [1, 1]} : vector<32x16xf32> to vector<16x16xf32>
    %125 = vector.extract_strided_slice %71 {offsets = [0, 16], sizes = [16, 16], strides = [1, 1]} : vector<16x32xf32> to vector<16x16xf32>
    %126 = arith.truncf %124 : vector<16x16xf32> to vector<16x16xbf16>
    %127 = arith.truncf %125 : vector<16x16xf32> to vector<16x16xbf16>
    %cst_36 = arith.constant dense<0.000000e+00> : vector<16x16xf32>
    %128 = tpu.matmul %126, %127, %cst_36 {dimension_numbers = #tpu.dot_dimension_numbers<[1], [0], [0], [1], [0, 0, 1, 1], [], []>} : vector<16x16xbf16>, vector<16x16xbf16>, vector<16x16xf32> -> vector<16x16xf32>
    %129 = tpu.concatenate %123, %128 in 1 : vector<16x16xf32>, vector<16x16xf32> -> vector<16x32xf32>
    %c1_37 = arith.constant 1 : index
    %c0_38 = arith.constant 0 : index
    %c0_39 = arith.constant 0 : index
    %130 = vector.load %arg5[%c1_37, %c0_38, %c0_39] : memref<3x1x32xf32, #tpu.memory_space<vmem>>, vector<1x1x32xf32>
    %131 = vector.shape_cast %130 : vector<1x1x32xf32> to vector<1x32xf32>
    %132 = vector.broadcast %131 : vector<1x32xf32> to vector<16x32xf32>
    %133 = arith.addf %129, %132 : vector<16x32xf32>
    %cst_40 = arith.constant 0.000000e+00 : f32
    %134 = vector.broadcast %cst_40 : f32 to vector<16x32xf32>
    %135 = arith.maximumf %133, %134 : vector<16x32xf32>
    %c0_41 = arith.constant 0 : index
    %c0_42 = arith.constant 0 : index
    %136 = vector.load %arg8[%c0_41, %c0_42] : memref<32x8xbf16, #tpu.memory_space<vmem>>, vector<32x8xbf16>
    %137 = arith.truncf %135 : vector<16x32xf32> to vector<16x32xbf16>
    %cst_43 = arith.constant dense<0.000000e+00> : vector<16x8xf32>
    %138 = tpu.matmul %137, %136, %cst_43 {dimension_numbers = #tpu.dot_dimension_numbers<[1], [0], [0], [1], [0, 0, 1, 1], [], []>} : vector<16x32xbf16>, vector<32x8xbf16>, vector<16x8xf32> -> vector<16x8xf32>
    %c2 = arith.constant 2 : index
    %c0_44 = arith.constant 0 : index
    %c0_45 = arith.constant 0 : index
    %139 = vector.load %arg4[%c2, %c0_44, %c0_45] : memref<3x32x4xf32, #tpu.memory_space<vmem>>, vector<1x32x4xf32>
    %140 = vector.shape_cast %139 : vector<1x32x4xf32> to vector<32x4xf32>
    %141 = vector.extract_strided_slice %140 {offsets = [0, 0], sizes = [8, 4], strides = [1, 1]} : vector<32x4xf32> to vector<8x4xf32>
    %142 = arith.truncf %138 : vector<16x8xf32> to vector<16x8xbf16>
    %143 = arith.truncf %141 : vector<8x4xf32> to vector<8x4xbf16>
    %cst_46 = arith.constant dense<0.000000e+00> : vector<16x4xf32>
    %144 = tpu.matmul %142, %143, %cst_46 {dimension_numbers = #tpu.dot_dimension_numbers<[1], [0], [0], [1], [0, 0, 1, 1], [], []>} : vector<16x8xbf16>, vector<8x4xbf16>, vector<16x4xf32> -> vector<16x4xf32>
    %145 = vector.extract_strided_slice %144 {offsets = [0, 0], sizes = [16, 2], strides = [1, 1]} : vector<16x4xf32> to vector<16x2xf32>
    %146 = tpu.transpose %145, [1, 0] : vector<16x2xf32> -> vector<2x16xf32>
    %147 = vector.extract_strided_slice %144 {offsets = [0, 2], sizes = [16, 2], strides = [1, 1]} : vector<16x4xf32> to vector<16x2xf32>
    %148 = vector.extract_strided_slice %147 {offsets = [0, 0], sizes = [16, 1], strides = [1, 1]} : vector<16x2xf32> to vector<16x1xf32>
    %149 = vector.extract_strided_slice %146 {offsets = [0, 0], sizes = [1, 16], strides = [1, 1]} : vector<2x16xf32> to vector<1x16xf32>
    %150 = vector.broadcast %148 : vector<16x1xf32> to vector<16x16xf32>
    %151 = vector.broadcast %149 : vector<1x16xf32> to vector<16x16xf32>
    %152 = arith.addf %150, %151 : vector<16x16xf32>
    %cst_47 = arith.constant 0.000000e+00 : f32
    %153 = vector.broadcast %cst_47 : f32 to vector<16x16xf32>
    %154 = arith.cmpf oge, %152, %153 : vector<16x16xf32>
    %cst_48 = arith.constant 2.000000e-01 : f32
    %155 = vector.broadcast %cst_48 : f32 to vector<16x16xf32>
    %156 = arith.mulf %155, %152 : vector<16x16xf32>
    %157 = arith.select %154, %152, %156 : vector<16x16xi1>, vector<16x16xf32>
    %158 = arith.extf %0 : vector<16x16xbf16> to vector<16x16xf32>
    %159 = arith.addf %157, %158 : vector<16x16xf32>
    %160 = vector.extract_strided_slice %147 {offsets = [0, 1], sizes = [16, 1], strides = [1, 1]} : vector<16x2xf32> to vector<16x1xf32>
    %161 = vector.extract_strided_slice %146 {offsets = [1, 0], sizes = [1, 16], strides = [1, 1]} : vector<2x16xf32> to vector<1x16xf32>
    %162 = vector.broadcast %160 : vector<16x1xf32> to vector<16x16xf32>
    %163 = vector.broadcast %161 : vector<1x16xf32> to vector<16x16xf32>
    %164 = arith.addf %162, %163 : vector<16x16xf32>
    %cst_49 = arith.constant 0.000000e+00 : f32
    %165 = vector.broadcast %cst_49 : f32 to vector<16x16xf32>
    %166 = arith.cmpf oge, %164, %165 : vector<16x16xf32>
    %cst_50 = arith.constant 2.000000e-01 : f32
    %167 = vector.broadcast %cst_50 : f32 to vector<16x16xf32>
    %168 = arith.mulf %167, %164 : vector<16x16xf32>
    %169 = arith.select %166, %164, %168 : vector<16x16xi1>, vector<16x16xf32>
    %170 = arith.extf %0 : vector<16x16xbf16> to vector<16x16xf32>
    %171 = arith.addf %169, %170 : vector<16x16xf32>
    %172 = tpu.concatenate %159, %171 in 0 : vector<16x16xf32>, vector<16x16xf32> -> vector<32x16xf32>
    %cst_51 = arith.constant dense<0xFF800000> : vector<32xf32>
    %173 = vector.multi_reduction <maximumf>, %172, %cst_51 [1] : vector<32x16xf32> to vector<32xf32>
    %174 = vector.shape_cast %173 : vector<32xf32> to vector<32x1xf32>
    %175 = vector.broadcast %174 : vector<32x1xf32> to vector<32x16xf32>
    %176 = arith.subf %172, %175 : vector<32x16xf32>
    %177 = math.exp %176 : vector<32x16xf32>
    %cst_52 = arith.constant dense<0.000000e+00> : vector<32xf32>
    %178 = vector.multi_reduction <add>, %177, %cst_52 [1] : vector<32x16xf32> to vector<32xf32>
    %179 = vector.shape_cast %178 : vector<32xf32> to vector<32x1xf32>
    %180 = tpu.reciprocal %179 {approx = true} : vector<32x1xf32> -> vector<32x1xf32>
    %181 = arith.mulf %179, %180 : vector<32x1xf32>
    %cst_53 = arith.constant 2.000000e+00 : f32
    %182 = vector.broadcast %cst_53 : f32 to vector<32x1xf32>
    %183 = arith.subf %182, %181 : vector<32x1xf32>
    %184 = arith.mulf %180, %183 : vector<32x1xf32>
    %185 = vector.broadcast %184 : vector<32x1xf32> to vector<32x16xf32>
    %186 = arith.mulf %177, %185 : vector<32x16xf32>
    %187 = vector.extract_strided_slice %186 {offsets = [0, 0], sizes = [16, 16], strides = [1, 1]} : vector<32x16xf32> to vector<16x16xf32>
    %188 = vector.extract_strided_slice %138 {offsets = [0, 0], sizes = [16, 4], strides = [1, 1]} : vector<16x8xf32> to vector<16x4xf32>
    %189 = arith.truncf %187 : vector<16x16xf32> to vector<16x16xbf16>
    %190 = arith.truncf %188 : vector<16x4xf32> to vector<16x4xbf16>
    %cst_54 = arith.constant dense<0.000000e+00> : vector<16x4xf32>
    %191 = tpu.matmul %189, %190, %cst_54 {dimension_numbers = #tpu.dot_dimension_numbers<[1], [0], [0], [1], [0, 0, 1, 1], [], []>} : vector<16x16xbf16>, vector<16x4xbf16>, vector<16x4xf32> -> vector<16x4xf32>
    %192 = vector.extract_strided_slice %186 {offsets = [16, 0], sizes = [16, 16], strides = [1, 1]} : vector<32x16xf32> to vector<16x16xf32>
    %193 = vector.extract_strided_slice %138 {offsets = [0, 4], sizes = [16, 4], strides = [1, 1]} : vector<16x8xf32> to vector<16x4xf32>
    %194 = arith.truncf %192 : vector<16x16xf32> to vector<16x16xbf16>
    %195 = arith.truncf %193 : vector<16x4xf32> to vector<16x4xbf16>
    %cst_55 = arith.constant dense<0.000000e+00> : vector<16x4xf32>
    %196 = tpu.matmul %194, %195, %cst_55 {dimension_numbers = #tpu.dot_dimension_numbers<[1], [0], [0], [1], [0, 0, 1, 1], [], []>} : vector<16x16xbf16>, vector<16x4xbf16>, vector<16x4xf32> -> vector<16x4xf32>
    %197 = tpu.concatenate %191, %196 in 1 : vector<16x4xf32>, vector<16x4xf32> -> vector<16x8xf32>
    %c2_56 = arith.constant 2 : index
    %c0_57 = arith.constant 0 : index
    %c0_58 = arith.constant 0 : index
    %198 = vector.load %arg5[%c2_56, %c0_57, %c0_58] : memref<3x1x32xf32, #tpu.memory_space<vmem>>, vector<1x1x32xf32>
    %199 = vector.shape_cast %198 : vector<1x1x32xf32> to vector<1x32xf32>
    %200 = vector.extract_strided_slice %199 {offsets = [0, 0], sizes = [1, 8], strides = [1, 1]} : vector<1x32xf32> to vector<1x8xf32>
    %201 = vector.broadcast %200 : vector<1x8xf32> to vector<16x8xf32>
    %202 = arith.addf %197, %201 : vector<16x8xf32>
    %c0_59 = arith.constant 0 : index
    %c0_60 = arith.constant 0 : index
    %203 = vector.load %arg3[%c0_59, %c0_60] : memref<2x16xbf16, #tpu.memory_space<vmem>>, vector<2x16xbf16>
    %204 = arith.truncf %202 : vector<16x8xf32> to vector<16x8xbf16>
    %cst_61 = arith.constant dense<0.000000e+00> : vector<2x8xf32>
    %205 = tpu.matmul %203, %204, %cst_61 {dimension_numbers = #tpu.dot_dimension_numbers<[1], [0], [0], [1], [0, 0, 1, 1], [], []>} : vector<2x16xbf16>, vector<16x8xbf16>, vector<2x8xf32> -> vector<2x8xf32>
    %c0_62 = arith.constant 0 : index
    %c0_63 = arith.constant 0 : index
    %206 = vector.load %arg9[%c0_62, %c0_63] : memref<2x8xf32, #tpu.memory_space<vmem>>, vector<2x8xf32>
    tpu.vector_store %arg9[%c0_62, %c0_63], %205 {strides = array<i32>} : memref<2x8xf32, #tpu.memory_space<vmem>>, vector<2x8xf32>,
    return
  }
  func.func @transform_0(%arg0: i32) -> (i32, i32) {
    %c0_i32 = arith.constant 0 : i32
    %c0_i32_0 = arith.constant 0 : i32
    %c0_i32_1 = arith.constant 0 : i32
    return %c0_i32, %c0_i32_0 : i32, i32
  }
  func.func @transform_1(%arg0: i32) -> (i32, i32) {
    %c0_i32 = arith.constant 0 : i32
    %c0_i32_0 = arith.constant 0 : i32
    %c0_i32_1 = arith.constant 0 : i32
    return %c0_i32, %c0_i32_0 : i32, i32
  }
  func.func @transform_2(%arg0: i32) -> (i32, i32) {
    %c0_i32 = arith.constant 0 : i32
    %c0_i32_0 = arith.constant 0 : i32
    %c0_i32_1 = arith.constant 0 : i32
    return %c0_i32, %c0_i32_0 : i32, i32
  }
  func.func @transform_3(%arg0: i32) -> (i32, i32, i32) {
    %c0_i32 = arith.constant 0 : i32
    %c0_i32_0 = arith.constant 0 : i32
    %c0_i32_1 = arith.constant 0 : i32
    %c0_i32_2 = arith.constant 0 : i32
    return %c0_i32, %c0_i32_0, %c0_i32_1 : i32, i32, i32
  }
  func.func @transform_4(%arg0: i32) -> (i32, i32, i32) {
    %c0_i32 = arith.constant 0 : i32
    %c0_i32_0 = arith.constant 0 : i32
    %c0_i32_1 = arith.constant 0 : i32
    %c0_i32_2 = arith.constant 0 : i32
    return %c0_i32, %c0_i32_0, %c0_i32_1 : i32, i32, i32
  }
  func.func @transform_5(%arg0: i32) -> (i32, i32) {
    %c0_i32 = arith.constant 0 : i32
    %c0_i32_0 = arith.constant 0 : i32
    %c0_i32_1 = arith.constant 0 : i32
    return %c0_i32, %c0_i32_0 : i32, i32
  }
  func.func @transform_6(%arg0: i32) -> (i32, i32) {
    %c0_i32 = arith.constant 0 : i32
    %c0_i32_0 = arith.constant 0 : i32
    %c0_i32_1 = arith.constant 0 : i32
    return %c0_i32, %c0_i32_0 : i32, i32
  }
  func.func @transform_7(%arg0: i32) -> (i32, i32) {
    %c0_i32 = arith.constant 0 : i32
    %c0_i32_0 = arith.constant 0 : i32
    %c0_i32_1 = arith.constant 0 : i32
    return %c0_i32, %c0_i32_0 : i32, i32
  }
  func.func @transform_8(%arg0: i32) -> (i32, i32) {
    %c0_i32 = arith.constant 0 : i32
    %c0_i32_0 = arith.constant 0 : i32
    %c0_i32_1 = arith.constant 0 : i32
    return %c0_i32, %c0_i32_0 : i32, i32
  }
}

</mosaic_0001>

<llo_original>
// kernel: tpu_custom_call.1
$region0: #{tpu_custom_call.1}
  #allocation0 [shape = 'u32[]', space=smem, size = 0x4, offset = 0x4, fixed_abs, tag = 'smem constant byte address 0x4 - core index']
  #allocation1 [shape = 'u32[144,128]{1,0:T(1,128)}', space=vmem, size = 0x12000, scoped, tag = 'internal scratch']
  %s0 = inlined_call_operand.vmem [shape: f32[16,8], index: 0, kind: input, shape index: {}]
  %s1 = inlined_call_operand.vmem [shape: bf16[16,16], index: 1, kind: input, shape index: {}]
  %s2 = inlined_call_operand.vmem [shape: bf16[2,16], index: 2, kind: input, shape index: {}]
  %s3 = inlined_call_operand.vmem [shape: f32[3,32,4], index: 3, kind: input, shape index: {}]
  %s4 = inlined_call_operand.vmem [shape: f32[3,1,32], index: 4, kind: input, shape index: {}]
  %s5 = inlined_call_operand.vmem [shape: bf16[8,32], index: 5, kind: input, shape index: {}]
  %s6 = inlined_call_operand.vmem [shape: bf16[32,32], index: 6, kind: input, shape index: {}]
  %s7 = inlined_call_operand.vmem [shape: bf16[32,8], index: 7, kind: input, shape index: {}]
  %s8 = inlined_call_operand.hbm [shape: f32[2,8], index: 8, kind: output, shape index: {}]
  %s9 = sld [smem:[#allocation0]]
  $region42: #{tpu_custom_call.1} parent=0
    _
  %s11 = ssub.s32 1, %s9
  %s12 = scalar_select 0, %s11, %s9
  $region1: #{tpu_custom_call.1} parent=0
    #allocation2 [shape = 'u8[1024]{0}', space=vmem, size = 0x400, scoped, tag = 'output window, operand 0, single buffered']
    #allocation3 [shape = 's32[1]{0}', space=sflag, size = 0x4, scoped, tag = 'scoped memory for tpu_custom_call.1']
    %13 = vsyncpa [#allocation3], 0
    // Predicated region
    $region2: #{tpu_custom_call.1} parent=1 // pred_check
      _
    $region3: #{tpu_custom_call.1} parent=1 // pred_check_branch
      %15 = sbr.rel (0) target = $region5
    $region4: #{tpu_custom_call.1} parent=1 // pred_region
      _
    $region5: #{tpu_custom_call.1} parent=1 // pred_fallthru
      _
    // Predicated region
    $region6: #{tpu_custom_call.1} parent=1 // pred_check
      _
    $region7: #{tpu_custom_call.1} parent=1 // pred_check_branch
      %17 = sbr.rel (0) target = $region9
    $region8: #{tpu_custom_call.1} parent=1 // pred_region
      _
    $region9: #{tpu_custom_call.1} parent=1 // pred_fallthru
      _
    // Predicated region
    $region10: #{tpu_custom_call.1} parent=1 // pred_check
      _
    $region11: #{tpu_custom_call.1} parent=1 // pred_check_branch
      %19 = sbr.rel (0) target = $region13
    $region12: #{tpu_custom_call.1} parent=1 // pred_region
      _
    $region13: #{tpu_custom_call.1} parent=1 // pred_fallthru
      _
    // Predicated region
    $region14: #{tpu_custom_call.1} parent=1 // pred_check
      _
    $region15: #{tpu_custom_call.1} parent=1 // pred_check_branch
      %21 = sbr.rel (0) target = $region17
    $region16: #{tpu_custom_call.1} parent=1 // pred_region
      _
    $region17: #{tpu_custom_call.1} parent=1 // pred_fallthru
      _
    // Predicated region
    $region18: #{tpu_custom_call.1} parent=1 // pred_check
      _
    $region19: #{tpu_custom_call.1} parent=1 // pred_check_branch
      %23 = sbr.rel (0) target = $region21
    $region20: #{tpu_custom_call.1} parent=1 // pred_region
      _
    $region21: #{tpu_custom_call.1} parent=1 // pred_fallthru
      _
    // Predicated region
    $region22: #{tpu_custom_call.1} parent=1 // pred_check
      _
    $region23: #{tpu_custom_call.1} parent=1 // pred_check_branch
      %25 = sbr.rel (0) target = $region25
    $region24: #{tpu_custom_call.1} parent=1 // pred_region
      _
    $region25: #{tpu_custom_call.1} parent=1 // pred_fallthru
      _
    // Predicated region
    $region26: #{tpu_custom_call.1} parent=1 // pred_check
      _
    $region27: #{tpu_custom_call.1} parent=1 // pred_check_branch
      %27 = sbr.rel (0) target = $region29
    $region28: #{tpu_custom_call.1} parent=1 // pred_region
      _
    $region29: #{tpu_custom_call.1} parent=1 // pred_fallthru
      _
    // Predicated region
    $region30: #{tpu_custom_call.1} parent=1 // pred_check
      _
    $region31: #{tpu_custom_call.1} parent=1 // pred_check_branch
      %29 = sbr.rel (0) target = $region33
    $region32: #{tpu_custom_call.1} parent=1 // pred_region
      _
    $region33: #{tpu_custom_call.1} parent=1 // pred_fallthru
      _
    %v31 = vld [vmem:[%s1] sm:$0xf]
    %v32 = vld [vmem:[%s1 + $0x4] sm:$0xf]
    %v33 = vld [vmem:[%s0] sm:$0xff]
    %v34 = vld [vmem:[%s0 + $0x8] sm:$0xff]
    %v35 = vld [vmem:[%s5] sm:$0xf]
    %v36 = vpack.c.bf16 %v34, %v33
    %vm37 = vcmask 64512
    %v39 = vsel %vm37, %v36, 0
    %vm41 = vcmask 1043456
    %v43 = vsel %vm41, %v35, 0
    %45 = vmatprep.subr.bf16.mxu0 0
    %46 = vmatpush1.bf16.msra.mxu0 %v43
    %47 = vmatprep.subr.bf16.mxu0 0
    %48 = vmatpush1.bf16.msra.mxu0 0
    %49 = vmatprep.subr.bf16.mxu0 0
    %50 = vmatpush1.bf16.msra.mxu0 0
    %51 = vmatprep.subr.bf16.mxu0 0
    %52 = vmatpush1.bf16.msra.mxu0 0
    %53 = vmatprep.subr.bf16.mxu0 0
    %54 = vmatpush1.bf16.msra.mxu0 0
    %55 = vmatprep.subr.bf16.mxu0 0
    %56 = vmatpush1.bf16.msra.mxu0 0
    %57 = vmatprep.subr.bf16.mxu0 0
    %58 = vmatpush1.bf16.msra.mxu0 0
    %59 = vmatprep.subr.bf16.mxu0 0
    %60 = vmatpush1.bf16.msra.mxu0 0
    %61 = vmatprep.subr.bf16.mxu0 0
    %62 = vmatpush1.bf16.msra.mxu0 0
    %63 = vmatprep.subr.bf16.mxu0 0
    %64 = vmatpush1.bf16.msra.mxu0 0
    %65 = vmatprep.subr.bf16.mxu0 0
    %66 = vmatpush1.bf16.msra.mxu0 0
    %67 = vmatprep.subr.bf16.mxu0 0
    %68 = vmatpush1.bf16.msra.mxu0 0
    %69 = vmatprep.subr.bf16.mxu0 0
    %70 = vmatpush1.bf16.msra.mxu0 0
    %71 = vmatprep.subr.bf16.mxu0 0
    %72 = vmatpush1.bf16.msra.mxu0 0
    %73 = vmatprep.subr.bf16.mxu0 0
    %74 = vmatpush1.bf16.msra.mxu0 0
    %75 = vmatprep.subr.bf16.mxu0 0
    %76 = vmatpush1.bf16.msra.mxu0 0
    %77 = vmatprep.mubr.bf16.mxu0 0
    %78 = vmatmul.mubr.bf16.gmra.mrb[0].mxu0 %v39
    %v79 = vpop.f32.mrb[0].mxu0
    %v80 = vadd.f32 0.0, %v79
    %v81 = vpop.f32.mrb[0].mxu0
    %v82 = vpop.f32.mrb[0].mxu0
    %v83 = vadd.f32 0.0, %v82
    %v84 = vpop.f32.mrb[0].mxu0
    %85 = vdwg.mxu0
    %v86 = vld [vmem:[%s3] sm:$0xff]
    %v87 = vld [vmem:[%s3 + $0x8] sm:$0xff]
    %v88 = vld [vmem:[%s3 + $0x10] sm:$0xff]
    %v89 = vld [vmem:[%s3 + $0x18] sm:$0xff]
    %v90 = vpack.c.bf16 %v83, %v80
    %v91 = vpack.c.bf16 %v87, %v86
    %v92 = vpack.c.bf16 %v89, %v88
    %vm93 = vcmask 261120
    %v95 = vsel %vm93, %v90, 0
    %97 = vmatprep.subr.bf16.mxu0 0
    %98 = vmatpush1.bf16.msra.mxu0 %v91
    %99 = vmatprep.subr.bf16.mxu0 0
    %100 = vmatpush1.bf16.msra.mxu0 %v92
    %101 = vmatprep.subr.bf16.mxu0 0
    %102 = vmatpush1.bf16.msra.mxu0 0
    %103 = vmatprep.subr.bf16.mxu0 0
    %104 = vmatpush1.bf16.msra.mxu0 0
    %105 = vmatprep.subr.bf16.mxu0 0
    %106 = vmatpush1.bf16.msra.mxu0 0
    %107 = vmatprep.subr.bf16.mxu0 0
    %108 = vmatpush1.bf16.msra.mxu0 0
    %109 = vmatprep.subr.bf16.mxu0 0
    %110 = vmatpush1.bf16.msra.mxu0 0
    %111 = vmatprep.subr.bf16.mxu0 0
    %112 = vmatpush1.bf16.msra.mxu0 0
    %113 = vmatprep.subr.bf16.mxu0 0
    %114 = vmatpush1.bf16.msra.mxu0 0
    %115 = vmatprep.subr.bf16.mxu0 0
    %116 = vmatpush1.bf16.msra.mxu0 0
    %117 = vmatprep.subr.bf16.mxu0 0
    %118 = vmatpush1.bf16.msra.mxu0 0
    %119 = vmatprep.subr.bf16.mxu0 0
    %120 = vmatpush1.bf16.msra.mxu0 0
    %121 = vmatprep.subr.bf16.mxu0 0
    %122 = vmatpush1.bf16.msra.mxu0 0
    %123 = vmatprep.subr.bf16.mxu0 0
    %124 = vmatpush1.bf16.msra.mxu0 0
    %125 = vmatprep.subr.bf16.mxu0 0
    %126 = vmatpush1.bf16.msra.mxu0 0
    %127 = vmatprep.subr.bf16.mxu0 0
    %128 = vmatpush1.bf16.msra.mxu0 0
    %129 = vmatprep.mubr.bf16.mxu0 0
    %130 = vmatmul.mubr.bf16.gmra.mrb[0].mxu0 %v95
    %v131 = vpop.f32.mrb[0].mxu0
    %v132 = vadd.f32 0.0, %v131
    %v133 = vpop.f32.mrb[0].mxu0
    %v134 = vpop.f32.mrb[0].mxu0
    %v135 = vadd.f32 0.0, %v134
    %v136 = vpop.f32.mrb[0].mxu0
    %137 = vdwg.mxu0
    %138 = vxpose.xlu0.b32.start [1/16] %v132, 128
    %139 = vxpose.xlu0.b32.cont [2/16] %v135, 128
    %140 = vxpose.xlu0.b32.cont [3/16] 0.0, 128
    %141 = vxpose.xlu0.b32.cont [4/16] 0.0, 128
    %142 = vxpose.xlu0.b32.cont [5/16] 0.0, 128
    %143 = vxpose.xlu0.b32.cont [6/16] 0.0, 128
    %144 = vxpose.xlu0.b32.cont [7/16] 0.0, 128
    %145 = vxpose.xlu0.b32.cont [8/16] 0.0, 128
    %146 = vxpose.xlu0.b32.cont [9/16] 0.0, 128
    %147 = vxpose.xlu0.b32.cont [10/16] 0.0, 128
    %148 = vxpose.xlu0.b32.cont [11/16] 0.0, 128
    %149 = vxpose.xlu0.b32.cont [12/16] 0.0, 128
    %150 = vxpose.xlu0.b32.cont [13/16] 0.0, 128
    %151 = vxpose.xlu0.b32.cont [14/16] 0.0, 128
    %152 = vxpose.xlu0.b32.cont [15/16] 0.0, 128
    %153 = vxpose.xlu0.b32.end [16/16] 0.0, 128
    %v154 = vpop.trf.xlu0
    %v155 = vpop.trf.xlu0
    %v156 = vpop.trf.xlu0
    %v157 = vpop.trf.xlu0
    %v158 = vpop.trf.xlu0
    %v159 = vpop.trf.xlu0
    %v160 = vpop.trf.xlu0
    %v161 = vpop.trf.xlu0
    %v162 = vpop.trf.xlu0
    %v163 = vpop.trf.xlu0
    %v164 = vpop.trf.xlu0
    %v165 = vpop.trf.xlu0
    %v166 = vpop.trf.xlu0
    %v167 = vpop.trf.xlu0
    %v168 = vpop.trf.xlu0
    %v169 = vpop.trf.xlu0
    %171 = vset.pattern.permute.xlu0 2
    %172 = vperm.xlu0 %171, %v132
    %v173 = vpop.permute.xlu0 %172
    %176 = vset.pattern.permute.xlu0 2
    %177 = vperm.xlu0 %176, %v135
    %v178 = vpop.permute.xlu0 %177
    %v180 = vlaneseq
    %v181 = vshrl.u32 %v180, 7
    %v182 = vsub.s32 0, %v181
    %v183 = vrot.slane %v154, %v182
    %v184 = vadd.f32 %v173, %v183
    %v185 = vadd.f32 %v178, %v183
    %vm186 = vcmp.ge.f32.partialorder %v184, 0.0
    %vm187 = vcmp.ge.f32.partialorder %v185, 0.0
    %v188 = vmul.f32 %v184, 0.2
    %v189 = vmul.f32 %v185, 0.2
    %v190 = vsel %vm186, %v184, %v188
    %v191 = vsel %vm187, %v185, %v189
    %v192 = vunpack.c.l.bf16 %v31
    %v193 = vunpack.c.l.bf16 %v32
    %v194 = vadd.f32 %v190, %v192
    %v195 = vadd.f32 %v191, %v193
    %196 = vset.pattern.permute.xlu0 3
    %197 = vperm.xlu0 %196, %v132
    %v198 = vpop.permute.xlu0 %197
    %200 = vset.pattern.permute.xlu0 3
    %201 = vperm.xlu0 %200, %v135
    %v202 = vpop.permute.xlu0 %201
    %v204 = vlaneseq
    %v205 = vshrl.u32 %v204, 7
    %v206 = vsub.s32 1, %v205
    %v207 = vrot.slane %v154, %v206
    %v208 = vadd.f32 %v198, %v207
    %v209 = vadd.f32 %v202, %v207
    %vm210 = vcmp.ge.f32.partialorder %v208, 0.0
    %vm211 = vcmp.ge.f32.partialorder %v209, 0.0
    %v212 = vmul.f32 %v208, 0.2
    %v213 = vmul.f32 %v209, 0.2
    %v214 = vsel %vm210, %v208, %v212
    %v215 = vsel %vm211, %v209, %v213
    %v216 = vadd.f32 %v214, %v192
    %v217 = vadd.f32 %v215, %v193
    %vm218 = vcmask 130048
    %v219 = vsel %vm218, %v194, -inf
    %220 = vmax.xlane.f32.xlu0 %v219
    %v221 = vpop.xlane.xlu0 %220
    %v222 = vsel %vm218, %v195, -inf
    %223 = vmax.xlane.f32.xlu0 %v222
    %v224 = vpop.xlane.xlu0 %223
    %v225 = vsel %vm218, %v216, -inf
    %226 = vmax.xlane.f32.xlu0 %v225
    %v227 = vpop.xlane.xlu0 %226
    %v228 = vsel %vm218, %v217, -inf
    %229 = vmax.xlane.f32.xlu0 %v228
    %v230 = vpop.xlane.xlu0 %229
    %v231 = vsub.f32 %v194, %v221
    %v232 = vsub.f32 %v195, %v224
    %v233 = vsub.f32 %v216, %v227
    %v234 = vsub.f32 %v217, %v230
    %v235 = vmul.f32 %v231, 1.442695
    %v236 = vpow.pop %v235
    %v237 = vmul.f32 %v232, 1.442695
    %v238 = vpow.pop %v237
    %v239 = vmul.f32 %v233, 1.442695
    %v240 = vpow.pop %v239
    %v241 = vmul.f32 %v234, 1.442695
    %v242 = vpow.pop %v241
    %v243 = vsel %vm218, %v236, 0.0
    %244 = vadd.xlane.f32.xlu0 %v243
    %v245 = vpop.xlane.xlu0 %244
    %v246 = vsel %vm218, %v238, 0.0
    %247 = vadd.xlane.f32.xlu0 %v246
    %v248 = vpop.xlane.xlu0 %247
    %v249 = vsel %vm218, %v240, 0.0
    %250 = vadd.xlane.f32.xlu0 %v249
    %v251 = vpop.xlane.xlu0 %250
    %v252 = vsel %vm218, %v242, 0.0
    %253 = vadd.xlane.f32.xlu0 %v252
    %v254 = vpop.xlane.xlu0 %253
    %v255 = vrcp.pop %v245
    %v256 = vrcp.pop %v248
    %v257 = vrcp.pop %v251
    %v258 = vrcp.pop %v254
    %v259 = vmul.f32 %v245, %v255
    %v260 = vmul.f32 %v248, %v256
    %v261 = vmul.f32 %v251, %v257
    %v262 = vmul.f32 %v254, %v258
    %v263 = vsub.f32 2.0, %v259
    %v264 = vsub.f32 2.0, %v260
    %v265 = vsub.f32 2.0, %v261
    %v266 = vsub.f32 2.0, %v262
    %v267 = vmul.f32 %v255, %v263
    %v268 = vmul.f32 %v256, %v264
    %v269 = vmul.f32 %v257, %v265
    %v270 = vmul.f32 %v258, %v266
    %v271 = vmul.f32 %v236, %v267
    %v272 = vmul.f32 %v238, %v268
    %v273 = vmul.f32 %v240, %v269
    %v274 = vmul.f32 %v242, %v270
    %v275 = vpack.c.bf16 %v272, %v271
    %v277 = vsel %vm218, %v275, 0
    %279 = vmatprep.subr.bf16.mxu0 0
    %280 = vmatpush1.bf16.msra.mxu0 %v90
    %281 = vmatprep.subr.bf16.mxu0 0
    %282 = vmatpush1.bf16.msra.mxu0 0
    %283 = vmatprep.subr.bf16.mxu0 0
    %284 = vmatpush1.bf16.msra.mxu0 0
    %285 = vmatprep.subr.bf16.mxu0 0
    %286 = vmatpush1.bf16.msra.mxu0 0
    %287 = vmatprep.subr.bf16.mxu0 0
    %288 = vmatpush1.bf16.msra.mxu0 0
    %289 = vmatprep.subr.bf16.mxu0 0
    %290 = vmatpush1.bf16.msra.mxu0 0
    %291 = vmatprep.subr.bf16.mxu0 0
    %292 = vmatpush1.bf16.msra.mxu0 0
    %293 = vmatprep.subr.bf16.mxu0 0
    %294 = vmatpush1.bf16.msra.mxu0 0
    %295 = vmatprep.subr.bf16.mxu0 0
    %296 = vmatpush1.bf16.msra.mxu0 0
    %297 = vmatprep.subr.bf16.mxu0 0
    %298 = vmatpush1.bf16.msra.mxu0 0
    %299 = vmatprep.subr.bf16.mxu0 0
    %300 = vmatpush1.bf16.msra.mxu0 0
    %301 = vmatprep.subr.bf16.mxu0 0
    %302 = vmatpush1.bf16.msra.mxu0 0
    %303 = vmatprep.subr.bf16.mxu0 0
    %304 = vmatpush1.bf16.msra.mxu0 0
    %305 = vmatprep.subr.bf16.mxu0 0
    %306 = vmatpush1.bf16.msra.mxu0 0
    %307 = vmatprep.subr.bf16.mxu0 0
    %308 = vmatpush1.bf16.msra.mxu0 0
    %309 = vmatprep.subr.bf16.mxu0 0
    %310 = vmatpush1.bf16.msra.mxu0 0
    %311 = vmatprep.mubr.bf16.mxu0 0
    %312 = vmatmul.mubr.bf16.gmra.mrb[0].mxu0 %v277
    %v313 = vpop.f32.mrb[0].mxu0
    %v314 = vadd.f32 0.0, %v313
    %v315 = vpop.f32.mrb[0].mxu0
    %v316 = vpop.f32.mrb[0].mxu0
    %v317 = vadd.f32 0.0, %v316
    %v318 = vpop.f32.mrb[0].mxu0
    %319 = vdwg.mxu0
    %v320 = vpack.c.bf16 %v274, %v273
    %322 = vrot.lane.b32.xlu0 %v90, 112
    %v323 = vpop.permute.xlu0 %322
    %v326 = vsel %vm218, %v320, 0
    %328 = vmatprep.subr.bf16.mxu0 0
    %329 = vmatpush1.bf16.msra.mxu0 %v323
    %330 = vmatprep.subr.bf16.mxu0 0
    %331 = vmatpush1.bf16.msra.mxu0 0
    %332 = vmatprep.subr.bf16.mxu0 0
    %333 = vmatpush1.bf16.msra.mxu0 0
    %334 = vmatprep.subr.bf16.mxu0 0
    %335 = vmatpush1.bf16.msra.mxu0 0
    %336 = vmatprep.subr.bf16.mxu0 0
    %337 = vmatpush1.bf16.msra.mxu0 0
    %338 = vmatprep.subr.bf16.mxu0 0
    %339 = vmatpush1.bf16.msra.mxu0 0
    %340 = vmatprep.subr.bf16.mxu0 0
    %341 = vmatpush1.bf16.msra.mxu0 0
    %342 = vmatprep.subr.bf16.mxu0 0
    %343 = vmatpush1.bf16.msra.mxu0 0
    %344 = vmatprep.subr.bf16.mxu0 0
    %345 = vmatpush1.bf16.msra.mxu0 0
    %346 = vmatprep.subr.bf16.mxu0 0
    %347 = vmatpush1.bf16.msra.mxu0 0
    %348 = vmatprep.subr.bf16.mxu0 0
    %349 = vmatpush1.bf16.msra.mxu0 0
    %350 = vmatprep.subr.bf16.mxu0 0
    %351 = vmatpush1.bf16.msra.mxu0 0
    %352 = vmatprep.subr.bf16.mxu0 0
    %353 = vmatpush1.bf16.msra.mxu0 0
    %354 = vmatprep.subr.bf16.mxu0 0
    %355 = vmatpush1.bf16.msra.mxu0 0
    %356 = vmatprep.subr.bf16.mxu0 0
    %357 = vmatpush1.bf16.msra.mxu0 0
    %358 = vmatprep.subr.bf16.mxu0 0
    %359 = vmatpush1.bf16.msra.mxu0 0
    %360 = vmatprep.mubr.bf16.mxu0 0
    %361 = vmatmul.mubr.bf16.gmra.mrb[0].mxu0 %v326
    %v362 = vpop.f32.mrb[0].mxu0
    %v363 = vadd.f32 0.0, %v362
    %v364 = vpop.f32.mrb[0].mxu0
    %v365 = vpop.f32.mrb[0].mxu0
    %v366 = vadd.f32 0.0, %v365
    %v367 = vpop.f32.mrb[0].mxu0
    %368 = vdwg.mxu0
    %371 = vrot.lane.b32.xlu0 %v363, 16
    %v372 = vpop.permute.xlu0 %371
    %373 = vrot.lane.b32.xlu0 %v366, 16
    %v374 = vpop.permute.xlu0 %373
    %v377 = vsel %vm218, %v314, %v372
    %v378 = vsel %vm218, %v317, %v374
    %v379 = vld [vmem:[%s4] sm:$0x1]
    %v381 = vlaneseq
    %v382 = vshrl.u32 %v381, 7
    %v383 = vsub.s32 0, %v382
    %v384 = vrot.slane %v379, %v383
    %v386 = vadd.f32 %v377, %v384
    %v387 = vadd.f32 %v378, %v384
    %v388 = vmax.f32 %v386, 0.0
    %v389 = vmax.f32 %v387, 0.0
    %v390 = vld [vmem:[%s6] sm:$0xf]
    %v391 = vld [vmem:[%s6 + $0x4] sm:$0xf]
    %v392 = vld [vmem:[%s6 + $0x8] sm:$0xf]
    %v393 = vld [vmem:[%s6 + $0xc] sm:$0xf]
    %v394 = vpack.c.bf16 %v389, %v388
    %v399 = vunpack.c.l.b16 %v390
    %v400 = vunpack.c.l.b16 %v391
    %v401 = vunpack.c.l.b16 %v392
    %v402 = vunpack.c.l.b16 %v393
    %v403 = vpack.c.b16 %v400, %v399
    %v404 = vpack.c.b16 %v402, %v401
    %v408 = vsel %vm93, %v394, 0
    %410 = vmatprep.subr.bf16.mxu0 0
    %411 = vmatpush1.bf16.msra.mxu0 %v403
    %412 = vmatprep.subr.bf16.mxu0 0
    %413 = vmatpush1.bf16.msra.mxu0 %v404
    %414 = vmatprep.subr.bf16.mxu0 0
    %415 = vmatpush1.bf16.msra.mxu0 0
    %416 = vmatprep.subr.bf16.mxu0 0
    %417 = vmatpush1.bf16.msra.mxu0 0
    %418 = vmatprep.subr.bf16.mxu0 0
    %419 = vmatpush1.bf16.msra.mxu0 0
    %420 = vmatprep.subr.bf16.mxu0 0
    %421 = vmatpush1.bf16.msra.mxu0 0
    %422 = vmatprep.subr.bf16.mxu0 0
    %423 = vmatpush1.bf16.msra.mxu0 0
    %424 = vmatprep.subr.bf16.mxu0 0
    %425 = vmatpush1.bf16.msra.mxu0 0
    %426 = vmatprep.subr.bf16.mxu0 0
    %427 = vmatpush1.bf16.msra.mxu0 0
    %428 = vmatprep.subr.bf16.mxu0 0
    %429 = vmatpush1.bf16.msra.mxu0 0
    %430 = vmatprep.subr.bf16.mxu0 0
    %431 = vmatpush1.bf16.msra.mxu0 0
    %432 = vmatprep.subr.bf16.mxu0 0
    %433 = vmatpush1.bf16.msra.mxu0 0
    %434 = vmatprep.subr.bf16.mxu0 0
    %435 = vmatpush1.bf16.msra.mxu0 0
    %436 = vmatprep.subr.bf16.mxu0 0
    %437 = vmatpush1.bf16.msra.mxu0 0
    %438 = vmatprep.subr.bf16.mxu0 0
    %439 = vmatpush1.bf16.msra.mxu0 0
    %440 = vmatprep.subr.bf16.mxu0 0
    %441 = vmatpush1.bf16.msra.mxu0 0
    %442 = vmatprep.mubr.bf16.mxu0 0
    %443 = vmatmul.mubr.bf16.gmra.mrb[0].mxu0 %v408
    %v444 = vpop.f32.mrb[0].mxu0
    %v445 = vadd.f32 0.0, %v444
    %v446 = vpop.f32.mrb[0].mxu0
    %v447 = vpop.f32.mrb[0].mxu0
    %v448 = vadd.f32 0.0, %v447
    %v449 = vpop.f32.mrb[0].mxu0
    %450 = vdwg.mxu0
    %s451 = scalar_lea.vmem %s3, 32
    %v452 = vld [vmem:[%s451] sm:$0xff]
    %v453 = vld [vmem:[%s451 + $0x8] sm:$0xff]
    %v454 = vld [vmem:[%s451 + $0x10] sm:$0xff]
    %v455 = vld [vmem:[%s451 + $0x18] sm:$0xff]
    %v456 = vpack.c.bf16 %v448, %v445
    %v457 = vpack.c.bf16 %v453, %v452
    %v458 = vpack.c.bf16 %v455, %v454
    %v460 = vsel %vm93, %v456, 0
    %462 = vmatprep.subr.bf16.mxu0 0
    %463 = vmatpush1.bf16.msra.mxu0 %v457
    %464 = vmatprep.subr.bf16.mxu0 0
    %465 = vmatpush1.bf16.msra.mxu0 %v458
    %466 = vmatprep.subr.bf16.mxu0 0
    %467 = vmatpush1.bf16.msra.mxu0 0
    %468 = vmatprep.subr.bf16.mxu0 0
    %469 = vmatpush1.bf16.msra.mxu0 0
    %470 = vmatprep.subr.bf16.mxu0 0
    %471 = vmatpush1.bf16.msra.mxu0 0
    %472 = vmatprep.subr.bf16.mxu0 0
    %473 = vmatpush1.bf16.msra.mxu0 0
    %474 = vmatprep.subr.bf16.mxu0 0
    %475 = vmatpush1.bf16.msra.mxu0 0
    %476 = vmatprep.subr.bf16.mxu0 0
    %477 = vmatpush1.bf16.msra.mxu0 0
    %478 = vmatprep.subr.bf16.mxu0 0
    %479 = vmatpush1.bf16.msra.mxu0 0
    %480 = vmatprep.subr.bf16.mxu0 0
    %481 = vmatpush1.bf16.msra.mxu0 0
    %482 = vmatprep.subr.bf16.mxu0 0
    %483 = vmatpush1.bf16.msra.mxu0 0
    %484 = vmatprep.subr.bf16.mxu0 0
    %485 = vmatpush1.bf16.msra.mxu0 0
    %486 = vmatprep.subr.bf16.mxu0 0
    %487 = vmatpush1.bf16.msra.mxu0 0
    %488 = vmatprep.subr.bf16.mxu0 0
    %489 = vmatpush1.bf16.msra.mxu0 0
    %490 = vmatprep.subr.bf16.mxu0 0
    %491 = vmatpush1.bf16.msra.mxu0 0
    %492 = vmatprep.subr.bf16.mxu0 0
    %493 = vmatpush1.bf16.msra.mxu0 0
    %494 = vmatprep.mubr.bf16.mxu0 0
    %495 = vmatmul.mubr.bf16.gmra.mrb[0].mxu0 %v460
    %v496 = vpop.f32.mrb[0].mxu0
    %v497 = vadd.f32 0.0, %v496
    %v498 = vpop.f32.mrb[0].mxu0
    %v499 = vpop.f32.mrb[0].mxu0
    %v500 = vadd.f32 0.0, %v499
    %v501 = vpop.f32.mrb[0].mxu0
    %502 = vdwg.mxu0
    %503 = vxpose.xlu0.b32.start [1/16] %v497, 128
    %504 = vxpose.xlu0.b32.cont [2/16] %v500, 128
    %505 = vxpose.xlu0.b32.cont [3/16] 0.0, 128
    %506 = vxpose.xlu0.b32.cont [4/16] 0.0, 128
    %507 = vxpose.xlu0.b32.cont [5/16] 0.0, 128
    %508 = vxpose.xlu0.b32.cont [6/16] 0.0, 128
    %509 = vxpose.xlu0.b32.cont [7/16] 0.0, 128
    %510 = vxpose.xlu0.b32.cont [8/16] 0.0, 128
    %511 = vxpose.xlu0.b32.cont [9/16] 0.0, 128
    %512 = vxpose.xlu0.b32.cont [10/16] 0.0, 128
    %513 = vxpose.xlu0.b32.cont [11/16] 0.0, 128
    %514 = vxpose.xlu0.b32.cont [12/16] 0.0, 128
    %515 = vxpose.xlu0.b32.cont [13/16] 0.0, 128
    %516 = vxpose.xlu0.b32.cont [14/16] 0.0, 128
    %517 = vxpose.xlu0.b32.cont [15/16] 0.0, 128
    %518 = vxpose.xlu0.b32.end [16/16] 0.0, 128
    %v519 = vpop.trf.xlu0
    %v520 = vpop.trf.xlu0
    %v521 = vpop.trf.xlu0
    %v522 = vpop.trf.xlu0
    %v523 = vpop.trf.xlu0
    %v524 = vpop.trf.xlu0
    %v525 = vpop.trf.xlu0
    %v526 = vpop.trf.xlu0
    %v527 = vpop.trf.xlu0
    %v528 = vpop.trf.xlu0
    %v529 = vpop.trf.xlu0
    %v530 = vpop.trf.xlu0
    %v531 = vpop.trf.xlu0
    %v532 = vpop.trf.xlu0
    %v533 = vpop.trf.xlu0
    %v534 = vpop.trf.xlu0
    %536 = vset.pattern.permute.xlu0 2
    %537 = vperm.xlu0 %536, %v497
    %v538 = vpop.permute.xlu0 %537
    %541 = vset.pattern.permute.xlu0 2
    %542 = vperm.xlu0 %541, %v500
    %v543 = vpop.permute.xlu0 %542
    %v545 = vlaneseq
    %v546 = vshrl.u32 %v545, 7
    %v547 = vsub.s32 0, %v546
    %v548 = vrot.slane %v519, %v547
    %v549 = vadd.f32 %v538, %v548
    %v550 = vadd.f32 %v543, %v548
    %vm551 = vcmp.ge.f32.partialorder %v549, 0.0
    %vm552 = vcmp.ge.f32.partialorder %v550, 0.0
    %v553 = vmul.f32 %v549, 0.2
    %v554 = vmul.f32 %v550, 0.2
    %v555 = vsel %vm551, %v549, %v553
    %v556 = vsel %vm552, %v550, %v554
    %v557 = vadd.f32 %v555, %v192
    %v558 = vadd.f32 %v556, %v193
    %559 = vset.pattern.permute.xlu0 3
    %560 = vperm.xlu0 %559, %v497
    %v561 = vpop.permute.xlu0 %560
    %563 = vset.pattern.permute.xlu0 3
    %564 = vperm.xlu0 %563, %v500
    %v565 = vpop.permute.xlu0 %564
    %v567 = vlaneseq
    %v568 = vshrl.u32 %v567, 7
    %v569 = vsub.s32 1, %v568
    %v570 = vrot.slane %v519, %v569
    %v571 = vadd.f32 %v561, %v570
    %v572 = vadd.f32 %v565, %v570
    %vm573 = vcmp.ge.f32.partialorder %v571, 0.0
    %vm574 = vcmp.ge.f32.partialorder %v572, 0.0
    %v575 = vmul.f32 %v571, 0.2
    %v576 = vmul.f32 %v572, 0.2
    %v577 = vsel %vm573, %v571, %v575
    %v578 = vsel %vm574, %v572, %v576
    %v579 = vadd.f32 %v577, %v192
    %v580 = vadd.f32 %v578, %v193
    %v581 = vsel %vm218, %v557, -inf
    %582 = vmax.xlane.f32.xlu0 %v581
    %v583 = vpop.xlane.xlu0 %582
    %v584 = vsel %vm218, %v558, -inf
    %585 = vmax.xlane.f32.xlu0 %v584
    %v586 = vpop.xlane.xlu0 %585
    %v587 = vsel %vm218, %v579, -inf
    %588 = vmax.xlane.f32.xlu0 %v587
    %v589 = vpop.xlane.xlu0 %588
    %v590 = vsel %vm218, %v580, -inf
    %591 = vmax.xlane.f32.xlu0 %v590
    %v592 = vpop.xlane.xlu0 %591
    %v593 = vsub.f32 %v557, %v583
    %v594 = vsub.f32 %v558, %v586
    %v595 = vsub.f32 %v579, %v589
    %v596 = vsub.f32 %v580, %v592
    %v597 = vmul.f32 %v593, 1.442695
    %v598 = vpow.pop %v597
    %v599 = vmul.f32 %v594, 1.442695
    %v600 = vpow.pop %v599
    %v601 = vmul.f32 %v595, 1.442695
    %v602 = vpow.pop %v601
    %v603 = vmul.f32 %v596, 1.442695
    %v604 = vpow.pop %v603
    %v605 = vsel %vm218, %v598, 0.0
    %606 = vadd.xlane.f32.xlu0 %v605
    %v607 = vpop.xlane.xlu0 %606
    %v608 = vsel %vm218, %v600, 0.0
    %609 = vadd.xlane.f32.xlu0 %v608
    %v610 = vpop.xlane.xlu0 %609
    %v611 = vsel %vm218, %v602, 0.0
    %612 = vadd.xlane.f32.xlu0 %v611
    %v613 = vpop.xlane.xlu0 %612
    %v614 = vsel %vm218, %v604, 0.0
    %615 = vadd.xlane.f32.xlu0 %v614
    %v616 = vpop.xlane.xlu0 %615
    %v617 = vrcp.pop %v607
    %v618 = vrcp.pop %v610
    %v619 = vrcp.pop %v613
    %v620 = vrcp.pop %v616
    %v621 = vmul.f32 %v607, %v617
    %v622 = vmul.f32 %v610, %v618
    %v623 = vmul.f32 %v613, %v619
    %v624 = vmul.f32 %v616, %v620
    %v625 = vsub.f32 2.0, %v621
    %v626 = vsub.f32 2.0, %v622
    %v627 = vsub.f32 2.0, %v623
    %v628 = vsub.f32 2.0, %v624
    %v629 = vmul.f32 %v617, %v625
    %v630 = vmul.f32 %v618, %v626
    %v631 = vmul.f32 %v619, %v627
    %v632 = vmul.f32 %v620, %v628
    %v633 = vmul.f32 %v598, %v629
    %v634 = vmul.f32 %v600, %v630
    %v635 = vmul.f32 %v602, %v631
    %v636 = vmul.f32 %v604, %v632
    %v637 = vpack.c.bf16 %v634, %v633
    %v639 = vsel %vm218, %v637, 0
    %641 = vmatprep.subr.bf16.mxu0 0
    %642 = vmatpush1.bf16.msra.mxu0 %v456
    %643 = vmatprep.subr.bf16.mxu0 0
    %644 = vmatpush1.bf16.msra.mxu0 0
    %645 = vmatprep.subr.bf16.mxu0 0
    %646 = vmatpush1.bf16.msra.mxu0 0
    %647 = vmatprep.subr.bf16.mxu0 0
    %648 = vmatpush1.bf16.msra.mxu0 0
    %649 = vmatprep.subr.bf16.mxu0 0
    %650 = vmatpush1.bf16.msra.mxu0 0
    %651 = vmatprep.subr.bf16.mxu0 0
    %652 = vmatpush1.bf16.msra.mxu0 0
    %653 = vmatprep.subr.bf16.mxu0 0
    %654 = vmatpush1.bf16.msra.mxu0 0
    %655 = vmatprep.subr.bf16.mxu0 0
    %656 = vmatpush1.bf16.msra.mxu0 0
    %657 = vmatprep.subr.bf16.mxu0 0
    %658 = vmatpush1.bf16.msra.mxu0 0
    %659 = vmatprep.subr.bf16.mxu0 0
    %660 = vmatpush1.bf16.msra.mxu0 0
    %661 = vmatprep.subr.bf16.mxu0 0
    %662 = vmatpush1.bf16.msra.mxu0 0
    %663 = vmatprep.subr.bf16.mxu0 0
    %664 = vmatpush1.bf16.msra.mxu0 0
    %665 = vmatprep.subr.bf16.mxu0 0
    %666 = vmatpush1.bf16.msra.mxu0 0
    %667 = vmatprep.subr.bf16.mxu0 0
    %668 = vmatpush1.bf16.msra.mxu0 0
    %669 = vmatprep.subr.bf16.mxu0 0
    %670 = vmatpush1.bf16.msra.mxu0 0
    %671 = vmatprep.subr.bf16.mxu0 0
    %672 = vmatpush1.bf16.msra.mxu0 0
    %673 = vmatprep.mubr.bf16.mxu0 0
    %674 = vmatmul.mubr.bf16.gmra.mrb[0].mxu0 %v639
    %v675 = vpop.f32.mrb[0].mxu0
    %v676 = vadd.f32 0.0, %v675
    %v677 = vpop.f32.mrb[0].mxu0
    %v678 = vpop.f32.mrb[0].mxu0
    %v679 = vadd.f32 0.0, %v678
    %v680 = vpop.f32.mrb[0].mxu0
    %681 = vdwg.mxu0
    %v682 = vpack.c.bf16 %v636, %v635
    %684 = vrot.lane.b32.xlu0 %v456, 112
    %v685 = vpop.permute.xlu0 %684
    %v688 = vsel %vm218, %v682, 0
    %690 = vmatprep.subr.bf16.mxu0 0
    %691 = vmatpush1.bf16.msra.mxu0 %v685
    %692 = vmatprep.subr.bf16.mxu0 0
    %693 = vmatpush1.bf16.msra.mxu0 0
    %694 = vmatprep.subr.bf16.mxu0 0
    %695 = vmatpush1.bf16.msra.mxu0 0
    %696 = vmatprep.subr.bf16.mxu0 0
    %697 = vmatpush1.bf16.msra.mxu0 0
    %698 = vmatprep.subr.bf16.mxu0 0
    %699 = vmatpush1.bf16.msra.mxu0 0
    %700 = vmatprep.subr.bf16.mxu0 0
    %701 = vmatpush1.bf16.msra.mxu0 0
    %702 = vmatprep.subr.bf16.mxu0 0
    %703 = vmatpush1.bf16.msra.mxu0 0
    %704 = vmatprep.subr.bf16.mxu0 0
    %705 = vmatpush1.bf16.msra.mxu0 0
    %706 = vmatprep.subr.bf16.mxu0 0
    %707 = vmatpush1.bf16.msra.mxu0 0
    %708 = vmatprep.subr.bf16.mxu0 0
    %709 = vmatpush1.bf16.msra.mxu0 0
    %710 = vmatprep.subr.bf16.mxu0 0
    %711 = vmatpush1.bf16.msra.mxu0 0
    %712 = vmatprep.subr.bf16.mxu0 0
    %713 = vmatpush1.bf16.msra.mxu0 0
    %714 = vmatprep.subr.bf16.mxu0 0
    %715 = vmatpush1.bf16.msra.mxu0 0
    %716 = vmatprep.subr.bf16.mxu0 0
    %717 = vmatpush1.bf16.msra.mxu0 0
    %718 = vmatprep.subr.bf16.mxu0 0
    %719 = vmatpush1.bf16.msra.mxu0 0
    %720 = vmatprep.subr.bf16.mxu0 0
    %721 = vmatpush1.bf16.msra.mxu0 0
    %722 = vmatprep.mubr.bf16.mxu0 0
    %723 = vmatmul.mubr.bf16.gmra.mrb[0].mxu0 %v688
    %v724 = vpop.f32.mrb[0].mxu0
    %v725 = vadd.f32 0.0, %v724
    %v726 = vpop.f32.mrb[0].mxu0
    %v727 = vpop.f32.mrb[0].mxu0
    %v728 = vadd.f32 0.0, %v727
    %v729 = vpop.f32.mrb[0].mxu0
    %730 = vdwg.mxu0
    %733 = vrot.lane.b32.xlu0 %v725, 16
    %v734 = vpop.permute.xlu0 %733
    %735 = vrot.lane.b32.xlu0 %v728, 16
    %v736 = vpop.permute.xlu0 %735
    %v739 = vsel %vm218, %v676, %v734
    %v740 = vsel %vm218, %v679, %v736
    %s741 = scalar_lea.vmem %s4, 1
    %v742 = vld [vmem:[%s741] sm:$0x1]
    %v744 = vlaneseq
    %v745 = vshrl.u32 %v744, 7
    %v746 = vsub.s32 0, %v745
    %v747 = vrot.slane %v742, %v746
    %v749 = vadd.f32 %v739, %v747
    %v750 = vadd.f32 %v740, %v747
    %v751 = vmax.f32 %v749, 0.0
    %v752 = vmax.f32 %v750, 0.0
    %v753 = vld [vmem:[%s7] sm:$0xf]
    %v754 = vld [vmem:[%s7 + $0x4] sm:$0xf]
    %v755 = vld [vmem:[%s7 + $0x8] sm:$0xf]
    %v756 = vld [vmem:[%s7 + $0xc] sm:$0xf]
    %v757 = vpack.c.bf16 %v752, %v751
    %v762 = vunpack.c.l.b16 %v753
    %v763 = vunpack.c.l.b16 %v754
    %v764 = vunpack.c.l.b16 %v755
    %v765 = vunpack.c.l.b16 %v756
    %v766 = vpack.c.b16 %v763, %v762
    %v767 = vpack.c.b16 %v765, %v764
    %v771 = vsel %vm93, %v757, 0
    %773 = vmatprep.subr.bf16.mxu0 0
    %774 = vmatpush1.bf16.msra.mxu0 %v766
    %775 = vmatprep.subr.bf16.mxu0 0
    %776 = vmatpush1.bf16.msra.mxu0 %v767
    %777 = vmatprep.subr.bf16.mxu0 0
    %778 = vmatpush1.bf16.msra.mxu0 0
    %779 = vmatprep.subr.bf16.mxu0 0
    %780 = vmatpush1.bf16.msra.mxu0 0
    %781 = vmatprep.subr.bf16.mxu0 0
    %782 = vmatpush1.bf16.msra.mxu0 0
    %783 = vmatprep.subr.bf16.mxu0 0
    %784 = vmatpush1.bf16.msra.mxu0 0
    %785 = vmatprep.subr.bf16.mxu0 0
    %786 = vmatpush1.bf16.msra.mxu0 0
    %787 = vmatprep.subr.bf16.mxu0 0
    %788 = vmatpush1.bf16.msra.mxu0 0
    %789 = vmatprep.subr.bf16.mxu0 0
    %790 = vmatpush1.bf16.msra.mxu0 0
    %791 = vmatprep.subr.bf16.mxu0 0
    %792 = vmatpush1.bf16.msra.mxu0 0
    %793 = vmatprep.subr.bf16.mxu0 0
    %794 = vmatpush1.bf16.msra.mxu0 0
    %795 = vmatprep.subr.bf16.mxu0 0
    %796 = vmatpush1.bf16.msra.mxu0 0
    %797 = vmatprep.subr.bf16.mxu0 0
    %798 = vmatpush1.bf16.msra.mxu0 0
    %799 = vmatprep.subr.bf16.mxu0 0
    %800 = vmatpush1.bf16.msra.mxu0 0
    %801 = vmatprep.subr.bf16.mxu0 0
    %802 = vmatpush1.bf16.msra.mxu0 0
    %803 = vmatprep.subr.bf16.mxu0 0
    %804 = vmatpush1.bf16.msra.mxu0 0
    %805 = vmatprep.mubr.bf16.mxu0 0
    %806 = vmatmul.mubr.bf16.gmra.mrb[0].mxu0 %v771
    %v807 = vpop.f32.mrb[0].mxu0
    %v808 = vadd.f32 0.0, %v807
    %v809 = vpop.f32.mrb[0].mxu0
    %v810 = vpop.f32.mrb[0].mxu0
    %v811 = vadd.f32 0.0, %v810
    %v812 = vpop.f32.mrb[0].mxu0
    %813 = vdwg.mxu0
    %s814 = scalar_lea.vmem %s3, 64
    %v815 = vld [vmem:[%s814] sm:$0xff]
    %v816 = vpack.c.bf16 %v811, %v808
    %v817 = vpack.c.bf16 %v815, %v815
    %v819 = vsel %vm37, %v816, 0
    %v822 = vsel %vm41, %v817, 0
    %824 = vmatprep.subr.bf16.mxu0 0
    %825 = vmatpush1.bf16.msra.mxu0 %v822
    %826 = vmatprep.subr.bf16.mxu0 0
    %827 = vmatpush1.bf16.msra.mxu0 0
    %828 = vmatprep.subr.bf16.mxu0 0
    %829 = vmatpush1.bf16.msra.mxu0 0
    %830 = vmatprep.subr.bf16.mxu0 0
    %831 = vmatpush1.bf16.msra.mxu0 0
    %832 = vmatprep.subr.bf16.mxu0 0
    %833 = vmatpush1.bf16.msra.mxu0 0
    %834 = vmatprep.subr.bf16.mxu0 0
    %835 = vmatpush1.bf16.msra.mxu0 0
    %836 = vmatprep.subr.bf16.mxu0 0
    %837 = vmatpush1.bf16.msra.mxu0 0
    %838 = vmatprep.subr.bf16.mxu0 0
    %839 = vmatpush1.bf16.msra.mxu0 0
    %840 = vmatprep.subr.bf16.mxu0 0
    %841 = vmatpush1.bf16.msra.mxu0 0
    %842 = vmatprep.subr.bf16.mxu0 0
    %843 = vmatpush1.bf16.msra.mxu0 0
    %844 = vmatprep.subr.bf16.mxu0 0
    %845 = vmatpush1.bf16.msra.mxu0 0
    %846 = vmatprep.subr.bf16.mxu0 0
    %847 = vmatpush1.bf16.msra.mxu0 0
    %848 = vmatprep.subr.bf16.mxu0 0
    %849 = vmatpush1.bf16.msra.mxu0 0
    %850 = vmatprep.subr.bf16.mxu0 0
    %851 = vmatpush1.bf16.msra.mxu0 0
    %852 = vmatprep.subr.bf16.mxu0 0
    %853 = vmatpush1.bf16.msra.mxu0 0
    %854 = vmatprep.subr.bf16.mxu0 0
    %855 = vmatpush1.bf16.msra.mxu0 0
    %856 = vmatprep.mubr.bf16.mxu0 0
    %857 = vmatmul.mubr.bf16.gmra.mrb[0].mxu0 %v819
    %v858 = vpop.f32.mrb[0].mxu0
    %v859 = vadd.f32 0.0, %v858
    %v860 = vpop.f32.mrb[0].mxu0
    %v861 = vpop.f32.mrb[0].mxu0
    %v862 = vadd.f32 0.0, %v861
    %v863 = vpop.f32.mrb[0].mxu0
    %864 = vdwg.mxu0
    %865 = vxpose.xlu0.b32.start [1/16] %v859, 128
    %866 = vxpose.xlu0.b32.cont [2/16] %v862, 128
    %867 = vxpose.xlu0.b32.cont [3/16] 0.0, 128
    %868 = vxpose.xlu0.b32.cont [4/16] 0.0, 128
    %869 = vxpose.xlu0.b32.cont [5/16] 0.0, 128
    %870 = vxpose.xlu0.b32.cont [6/16] 0.0, 128
    %871 = vxpose.xlu0.b32.cont [7/16] 0.0, 128
    %872 = vxpose.xlu0.b32.cont [8/16] 0.0, 128
    %873 = vxpose.xlu0.b32.cont [9/16] 0.0, 128
    %874 = vxpose.xlu0.b32.cont [10/16] 0.0, 128
    %875 = vxpose.xlu0.b32.cont [11/16] 0.0, 128
    %876 = vxpose.xlu0.b32.cont [12/16] 0.0, 128
    %877 = vxpose.xlu0.b32.cont [13/16] 0.0, 128
    %878 = vxpose.xlu0.b32.cont [14/16] 0.0, 128
    %879 = vxpose.xlu0.b32.cont [15/16] 0.0, 128
    %880 = vxpose.xlu0.b32.end [16/16] 0.0, 128
    %v881 = vpop.trf.xlu0
    %v882 = vpop.trf.xlu0
    %v883 = vpop.trf.xlu0
    %v884 = vpop.trf.xlu0
    %v885 = vpop.trf.xlu0
    %v886 = vpop.trf.xlu0
    %v887 = vpop.trf.xlu0
    %v888 = vpop.trf.xlu0
    %v889 = vpop.trf.xlu0
    %v890 = vpop.trf.xlu0
    %v891 = vpop.trf.xlu0
    %v892 = vpop.trf.xlu0
    %v893 = vpop.trf.xlu0
    %v894 = vpop.trf.xlu0
    %v895 = vpop.trf.xlu0
    %v896 = vpop.trf.xlu0
    %898 = vset.pattern.permute.xlu0 2
    %899 = vperm.xlu0 %898, %v859
    %v900 = vpop.permute.xlu0 %899
    %903 = vset.pattern.permute.xlu0 2
    %904 = vperm.xlu0 %903, %v862
    %v905 = vpop.permute.xlu0 %904
    %v907 = vlaneseq
    %v908 = vshrl.u32 %v907, 7
    %v909 = vsub.s32 0, %v908
    %v910 = vrot.slane %v881, %v909
    %v911 = vadd.f32 %v900, %v910
    %v912 = vadd.f32 %v905, %v910
    %vm913 = vcmp.ge.f32.partialorder %v911, 0.0
    %vm914 = vcmp.ge.f32.partialorder %v912, 0.0
    %v915 = vmul.f32 %v911, 0.2
    %v916 = vmul.f32 %v912, 0.2
    %v917 = vsel %vm913, %v911, %v915
    %v918 = vsel %vm914, %v912, %v916
    %v919 = vadd.f32 %v917, %v192
    %v920 = vadd.f32 %v918, %v193
    %921 = vset.pattern.permute.xlu0 3
    %922 = vperm.xlu0 %921, %v859
    %v923 = vpop.permute.xlu0 %922
    %925 = vset.pattern.permute.xlu0 3
    %926 = vperm.xlu0 %925, %v862
    %v927 = vpop.permute.xlu0 %926
    %v929 = vlaneseq
    %v930 = vshrl.u32 %v929, 7
    %v931 = vsub.s32 1, %v930
    %v932 = vrot.slane %v881, %v931
    %v933 = vadd.f32 %v923, %v932
    %v934 = vadd.f32 %v927, %v932
    %vm935 = vcmp.ge.f32.partialorder %v933, 0.0
    %vm936 = vcmp.ge.f32.partialorder %v934, 0.0
    %v937 = vmul.f32 %v933, 0.2
    %v938 = vmul.f32 %v934, 0.2
    %v939 = vsel %vm935, %v933, %v937
    %v940 = vsel %vm936, %v934, %v938
    %v941 = vadd.f32 %v939, %v192
    %v942 = vadd.f32 %v940, %v193
    %v943 = vsel %vm218, %v919, -inf
    %944 = vmax.xlane.f32.xlu0 %v943
    %v945 = vpop.xlane.xlu0 %944
    %v946 = vsel %vm218, %v920, -inf
    %947 = vmax.xlane.f32.xlu0 %v946
    %v948 = vpop.xlane.xlu0 %947
    %v949 = vsel %vm218, %v941, -inf
    %950 = vmax.xlane.f32.xlu0 %v949
    %v951 = vpop.xlane.xlu0 %950
    %v952 = vsel %vm218, %v942, -inf
    %953 = vmax.xlane.f32.xlu0 %v952
    %v954 = vpop.xlane.xlu0 %953
    %v955 = vsub.f32 %v919, %v945
    %v956 = vsub.f32 %v920, %v948
    %v957 = vsub.f32 %v941, %v951
    %v958 = vsub.f32 %v942, %v954
    %v959 = vmul.f32 %v955, 1.442695
    %v960 = vpow.pop %v959
    %v961 = vmul.f32 %v956, 1.442695
    %v962 = vpow.pop %v961
    %v963 = vmul.f32 %v957, 1.442695
    %v964 = vpow.pop %v963
    %v965 = vmul.f32 %v958, 1.442695
    %v966 = vpow.pop %v965
    %v967 = vsel %vm218, %v960, 0.0
    %968 = vadd.xlane.f32.xlu0 %v967
    %v969 = vpop.xlane.xlu0 %968
    %v970 = vsel %vm218, %v962, 0.0
    %971 = vadd.xlane.f32.xlu0 %v970
    %v972 = vpop.xlane.xlu0 %971
    %v973 = vsel %vm218, %v964, 0.0
    %974 = vadd.xlane.f32.xlu0 %v973
    %v975 = vpop.xlane.xlu0 %974
    %v976 = vsel %vm218, %v966, 0.0
    %977 = vadd.xlane.f32.xlu0 %v976
    %v978 = vpop.xlane.xlu0 %977
    %v979 = vrcp.pop %v969
    %v980 = vrcp.pop %v972
    %v981 = vrcp.pop %v975
    %v982 = vrcp.pop %v978
    %v983 = vmul.f32 %v969, %v979
    %v984 = vmul.f32 %v972, %v980
    %v985 = vmul.f32 %v975, %v981
    %v986 = vmul.f32 %v978, %v982
    %v987 = vsub.f32 2.0, %v983
    %v988 = vsub.f32 2.0, %v984
    %v989 = vsub.f32 2.0, %v985
    %v990 = vsub.f32 2.0, %v986
    %v991 = vmul.f32 %v979, %v987
    %v992 = vmul.f32 %v980, %v988
    %v993 = vmul.f32 %v981, %v989
    %v994 = vmul.f32 %v982, %v990
    %v995 = vmul.f32 %v960, %v991
    %v996 = vmul.f32 %v962, %v992
    %v997 = vmul.f32 %v964, %v993
    %v998 = vmul.f32 %v966, %v994
    %v999 = vpack.c.bf16 %v996, %v995
    %v1001 = vsel %vm218, %v999, 0
    %1003 = vmatprep.subr.bf16.mxu0 0
    %1004 = vmatpush1.bf16.msra.mxu0 %v816
    %1005 = vmatprep.subr.bf16.mxu0 0
    %1006 = vmatpush1.bf16.msra.mxu0 0
    %1007 = vmatprep.subr.bf16.mxu0 0
    %1008 = vmatpush1.bf16.msra.mxu0 0
    %1009 = vmatprep.subr.bf16.mxu0 0
    %1010 = vmatpush1.bf16.msra.mxu0 0
    %1011 = vmatprep.subr.bf16.mxu0 0
    %1012 = vmatpush1.bf16.msra.mxu0 0
    %1013 = vmatprep.subr.bf16.mxu0 0
    %1014 = vmatpush1.bf16.msra.mxu0 0
    %1015 = vmatprep.subr.bf16.mxu0 0
    %1016 = vmatpush1.bf16.msra.mxu0 0
    %1017 = vmatprep.subr.bf16.mxu0 0
    %1018 = vmatpush1.bf16.msra.mxu0 0
    %1019 = vmatprep.subr.bf16.mxu0 0
    %1020 = vmatpush1.bf16.msra.mxu0 0
    %1021 = vmatprep.subr.bf16.mxu0 0
    %1022 = vmatpush1.bf16.msra.mxu0 0
    %1023 = vmatprep.subr.bf16.mxu0 0
    %1024 = vmatpush1.bf16.msra.mxu0 0
    %1025 = vmatprep.subr.bf16.mxu0 0
    %1026 = vmatpush1.bf16.msra.mxu0 0
    %1027 = vmatprep.subr.bf16.mxu0 0
    %1028 = vmatpush1.bf16.msra.mxu0 0
    %1029 = vmatprep.subr.bf16.mxu0 0
    %1030 = vmatpush1.bf16.msra.mxu0 0
    %1031 = vmatprep.subr.bf16.mxu0 0
    %1032 = vmatpush1.bf16.msra.mxu0 0
    %1033 = vmatprep.subr.bf16.mxu0 0
    %1034 = vmatpush1.bf16.msra.mxu0 0
    %1035 = vmatprep.mubr.bf16.mxu0 0
    %1036 = vmatmul.mubr.bf16.gmra.mrb[0].mxu0 %v1001
    %v1037 = vpop.f32.mrb[0].mxu0
    %v1038 = vadd.f32 0.0, %v1037
    %v1039 = vpop.f32.mrb[0].mxu0
    %v1040 = vpop.f32.mrb[0].mxu0
    %v1041 = vadd.f32 0.0, %v1040
    %v1042 = vpop.f32.mrb[0].mxu0
    %1043 = vdwg.mxu0
    %v1044 = vpack.c.bf16 %v998, %v997
    %1046 = vrot.lane.b32.xlu0 %v816, 124
    %v1047 = vpop.permute.xlu0 %1046
    %v1050 = vsel %vm218, %v1044, 0
    %1052 = vmatprep.subr.bf16.mxu0 0
    %1053 = vmatpush1.bf16.msra.mxu0 %v1047
    %1054 = vmatprep.subr.bf16.mxu0 0
    %1055 = vmatpush1.bf16.msra.mxu0 0
    %1056 = vmatprep.subr.bf16.mxu0 0
    %1057 = vmatpush1.bf16.msra.mxu0 0
    %1058 = vmatprep.subr.bf16.mxu0 0
    %1059 = vmatpush1.bf16.msra.mxu0 0
    %1060 = vmatprep.subr.bf16.mxu0 0
    %1061 = vmatpush1.bf16.msra.mxu0 0
    %1062 = vmatprep.subr.bf16.mxu0 0
    %1063 = vmatpush1.bf16.msra.mxu0 0
    %1064 = vmatprep.subr.bf16.mxu0 0
    %1065 = vmatpush1.bf16.msra.mxu0 0
    %1066 = vmatprep.subr.bf16.mxu0 0
    %1067 = vmatpush1.bf16.msra.mxu0 0
    %1068 = vmatprep.subr.bf16.mxu0 0
    %1069 = vmatpush1.bf16.msra.mxu0 0
    %1070 = vmatprep.subr.bf16.mxu0 0
    %1071 = vmatpush1.bf16.msra.mxu0 0
    %1072 = vmatprep.subr.bf16.mxu0 0
    %1073 = vmatpush1.bf16.msra.mxu0 0
    %1074 = vmatprep.subr.bf16.mxu0 0
    %1075 = vmatpush1.bf16.msra.mxu0 0
    %1076 = vmatprep.subr.bf16.mxu0 0
    %1077 = vmatpush1.bf16.msra.mxu0 0
    %1078 = vmatprep.subr.bf16.mxu0 0
    %1079 = vmatpush1.bf16.msra.mxu0 0
    %1080 = vmatprep.subr.bf16.mxu0 0
    %1081 = vmatpush1.bf16.msra.mxu0 0
    %1082 = vmatprep.subr.bf16.mxu0 0
    %1083 = vmatpush1.bf16.msra.mxu0 0
    %1084 = vmatprep.mubr.bf16.mxu0 0
    %1085 = vmatmul.mubr.bf16.gmra.mrb[0].mxu0 %v1050
    %v1086 = vpop.f32.mrb[0].mxu0
    %v1087 = vadd.f32 0.0, %v1086
    %v1088 = vpop.f32.mrb[0].mxu0
    %v1089 = vpop.f32.mrb[0].mxu0
    %v1090 = vadd.f32 0.0, %v1089
    %v1091 = vpop.f32.mrb[0].mxu0
    %1092 = vdwg.mxu0
    %1095 = vrot.lane.b32.xlu0 %v1087, 4
    %v1096 = vpop.permute.xlu0 %1095
    %1097 = vrot.lane.b32.xlu0 %v1090, 4
    %v1098 = vpop.permute.xlu0 %1097
    %vm1101 = vcmask 31744
    %v1102 = vsel %vm1101, %v1038, %v1096
    %v1103 = vsel %vm1101, %v1041, %v1098
    %s1104 = scalar_lea.vmem %s4, 2
    %v1105 = vld [vmem:[%s1104] sm:$0x1]
    %v1107 = vlaneseq
    %v1108 = vshrl.u32 %v1107, 7
    %v1109 = vsub.s32 0, %v1108
    %v1110 = vrot.slane %v1105, %v1109
    %v1112 = vadd.f32 %v1102, %v1110
    %v1113 = vadd.f32 %v1103, %v1110
    %v1114 = vld [vmem:[%s2] sm:$0x1]
    %v1115 = vpack.c.bf16 %v1113, %v1112
    %v1117 = vsel %vm218, %v1114, 0
    %1119 = vmatprep.subr.bf16.mxu0 0
    %1120 = vmatpush1.bf16.msra.mxu0 %v1115
    %1121 = vmatprep.subr.bf16.mxu0 0
    %1122 = vmatpush1.bf16.msra.mxu0 0
    %1123 = vmatprep.subr.bf16.mxu0 0
    %1124 = vmatpush1.bf16.msra.mxu0 0
    %1125 = vmatprep.subr.bf16.mxu0 0
    %1126 = vmatpush1.bf16.msra.mxu0 0
    %1127 = vmatprep.subr.bf16.mxu0 0
    %1128 = vmatpush1.bf16.msra.mxu0 0
    %1129 = vmatprep.subr.bf16.mxu0 0
    %1130 = vmatpush1.bf16.msra.mxu0 0
    %1131 = vmatprep.subr.bf16.mxu0 0
    %1132 = vmatpush1.bf16.msra.mxu0 0
    %1133 = vmatprep.subr.bf16.mxu0 0
    %1134 = vmatpush1.bf16.msra.mxu0 0
    %1135 = vmatprep.subr.bf16.mxu0 0
    %1136 = vmatpush1.bf16.msra.mxu0 0
    %1137 = vmatprep.subr.bf16.mxu0 0
    %1138 = vmatpush1.bf16.msra.mxu0 0
    %1139 = vmatprep.subr.bf16.mxu0 0
    %1140 = vmatpush1.bf16.msra.mxu0 0
    %1141 = vmatprep.subr.bf16.mxu0 0
    %1142 = vmatpush1.bf16.msra.mxu0 0
    %1143 = vmatprep.subr.bf16.mxu0 0
    %1144 = vmatpush1.bf16.msra.mxu0 0
    %1145 = vmatprep.subr.bf16.mxu0 0
    %1146 = vmatpush1.bf16.msra.mxu0 0
    %1147 = vmatprep.subr.bf16.mxu0 0
    %1148 = vmatpush1.bf16.msra.mxu0 0
    %1149 = vmatprep.subr.bf16.mxu0 0
    %1150 = vmatpush1.bf16.msra.mxu0 0
    %1151 = vmatprep.mubr.bf16.mxu0 0
    %1152 = vmatmul.mubr.bf16.gmra.mrb[0].mxu0 %v1117
    %v1153 = vpop.f32.mrb[0].mxu0
    %v1154 = vadd.f32 0.0, %v1153
    %v1155 = vpop.f32.mrb[0].mxu0
    %v1156 = vpop.f32.mrb[0].mxu0
    %v1157 = vpop.f32.mrb[0].mxu0
    %1158 = vdwg.mxu0
    %vm1159 = vcmask 58368
    %1160 = vst.msk [vmem:[#allocation2] sm:$0x3] %vm1159, %v1154
    // Predicated region
    $region34: #{tpu_custom_call.1} parent=1 // pred_check
      _
    $region35: #{tpu_custom_call.1} parent=1 // pred_check_branch
      %1162 = sbr.rel (0) target = $region37
    $region36: #{tpu_custom_call.1} parent=1 // pred_region
      %s1164 = ssub.s32 32, 32
      %1165 = vsyncadd [#allocation3], %s1164
      %s1167 = sshll.u32 [#allocation2], 4
      %s1168 = int_to_ptr.vmem [resolvable:$true] %s1167
      %1170 = dma.vmem_to_hbm [thread:$0]  %s1168, 32, %s8, [#allocation3]
    $region37: #{tpu_custom_call.1} parent=1 // pred_fallthru
      _
    // Predicated region
    $region38: #{tpu_custom_call.1} parent=1 // pred_check
      _
    $region39: #{tpu_custom_call.1} parent=1 // pred_check_branch
      %1172 = sbr.rel (0) target = $region41
    $region40: #{tpu_custom_call.1} parent=1 // pred_region
      %1173 = dma.done [#allocation3], 32
    $region41: #{tpu_custom_call.1} parent=1 // pred_fallthru
      _
    %1174 = vsyncpa [#allocation3], 1

</llo_original>
